<compile_context>
chip_gen: v5e
topology: v5e:2x2
jax: 0.10.0
libtpu: 0.0.40
codegen_flags: <defaults>
</compile_context>

<pallas_src>
import functools

import jax
import jax.numpy as jnp
from jax.experimental import pallas as pl
from jax.experimental.pallas import tpu as pltpu


# ---------------------------------------------------------------------------
# Small helpers
# ---------------------------------------------------------------------------

def _pick_tile(dim, preferred):
    """Largest preferred tile that evenly divides `dim`, else the full dim."""
    for t in preferred:
        if dim >= t and dim % t == 0:
            return t
    return dim


def _compiler_params(dimension_semantics):
    kwargs = dict(dimension_semantics=dimension_semantics)
    try:
        cap = pltpu.get_tpu_info().vmem_capacity_bytes
        kwargs["vmem_limit_bytes"] = int(cap * 3 // 4)   # generation-aware scoped limit
    except Exception:
        pass
    return pltpu.CompilerParams(**kwargs)


def _deinterleave_last(x):
    """[x0, x1, x2, x3, ...] -> [x0, x2, ..., x1, x3, ...] along the last axis."""
    *lead, d = x.shape
    return x.reshape(*lead, d // 2, 2).swapaxes(-1, -2).reshape(*lead, d)


# ---------------------------------------------------------------------------
# Tiled linear (x @ w + b) — MXU matmul with pipelined K-reduction
# ---------------------------------------------------------------------------

def _linear_kernel(x_ref, w_ref, b_ref, o_ref, acc_ref):
    @pl.when(pl.program_id(2) == 0)
    def _init():
        acc_ref[...] = jnp.zeros_like(acc_ref)

    acc_ref[...] += jnp.dot(x_ref[...], w_ref[...],
                            preferred_element_type=jnp.float32)

    @pl.when(pl.program_id(2) == pl.num_programs(2) - 1)
    def _finalize():
        o_ref[...] = (acc_ref[...] + b_ref[...].astype(jnp.float32)).astype(o_ref.dtype)


def linear(x, w, b):
    """y = x @ w + b.  x: (..., K), w: (K, N), b: (N,)."""
    orig_shape = x.shape
    K = orig_shape[-1]
    N = w.shape[1]
    x2 = x.reshape(-1, K)
    M = x2.shape[0]

    tm = _pick_tile(M, (256, 128))
    tn = _pick_tile(N, (256, 128))
    tk = _pick_tile(K, (512, 256, 128))
    grid = (M // tm, N // tn, K // tk)

    itemsize = jnp.dtype(x.dtype).itemsize
    cost = pl.CostEstimate(flops=2 * M * N * K, transcendentals=0,
                           bytes_accessed=(M * K + K * N + M * N) * itemsize)

    out = pl.pallas_call(
        _linear_kernel,
        out_shape=jax.ShapeDtypeStruct((M, N), x.dtype),
        grid=grid,
        in_specs=[
            pl.BlockSpec((tm, tk), lambda i, j, k: (i, k)),
            pl.BlockSpec((tk, tn), lambda i, j, k: (k, j)),
            pl.BlockSpec((1, tn), lambda i, j, k: (0, j)),
        ],
        out_specs=pl.BlockSpec((tm, tn), lambda i, j, k: (i, j)),
        scratch_shapes=[pltpu.VMEM((tm, tn), jnp.float32)],
        compiler_params=_compiler_params(("parallel", "parallel", "arbitrary")),
        cost_estimate=cost,
    )(x2, w, b.reshape(1, N))
    return out.reshape(*orig_shape[:-1], N)


# ---------------------------------------------------------------------------
# Flash attention with fused RMSNorm + RoPE on the Q/K tiles
# ---------------------------------------------------------------------------

def _rmsnorm_rope(x, ca, cb, eps):
    """RMSNorm over head_dim followed by RoPE on one (rows, head_dim) tile.

    `ca`/`cb` are RoPE rotation coefficients in the de-interleaved layout with
    the RMSNorm elementwise weight folded in:  out = ca*n + cb*rotate_half(n).
    """
    xf = x.astype(jnp.float32)
    var = jnp.mean(xf * xf, axis=-1, keepdims=True)
    n = (xf * jax.lax.rsqrt(var + eps)).astype(x.dtype).astype(jnp.float32)
    half = n.shape[-1] // 2
    # rotate-half (== pltpu.roll(n, half, axis=-1)); static lane slices keep the
    # lowering robust for any head_dim.
    n_rot = jnp.concatenate([n[:, half:], n[:, :half]], axis=-1)
    return ca * n + cb * n_rot


def _flash_attn_kernel(q_ref, k_ref, v_ref, caq_ref, cbq_ref, cak_ref, cbk_ref,
                       o_ref, m_sc, l_sc, acc_sc, q_sc,
                       *, scale, eps, causal, block_q, block_kv):
    kv_i = pl.program_id(3)

    @pl.when(kv_i == 0)
    def _init():
        qn = _rmsnorm_rope(q_ref[...], caq_ref[...], cbq_ref[...], eps)
        q_sc[...] = (qn * scale).astype(q_sc.dtype)     # softmax scale folded into Q once
        m_sc[...] = jnp.full(m_sc.shape, -jnp.inf, jnp.float32)
        l_sc[...] = jnp.zeros(l_sc.shape, jnp.float32)
        acc_sc[...] = jnp.zeros(acc_sc.shape, jnp.float32)

    kn = _rmsnorm_rope(k_ref[...], cak_ref[...], cbk_ref[...], eps).astype(q_sc.dtype)

    # (block_q, block_kv) scores; contract head_dim without an explicit k.T.
    s = jax.lax.dot_general(q_sc[...], kn, (((1,), (1,)), ((), ())),
                            preferred_element_type=jnp.float32)

    if causal:
        row = pl.program_id(2) * block_q + jax.lax.broadcasted_iota(jnp.int32, s.shape, 0)
        col = kv_i * block_kv + jax.lax.broadcasted_iota(jnp.int32, s.shape, 1)
        s = jnp.where(row >= col, s, -jnp.inf)

    m_prev = m_sc[...]
    m_new = jnp.maximum(m_prev, jnp.max(s, axis=-1, keepdims=True))
    alpha = jnp.exp(m_prev - m_new)
    p = jnp.exp(s - m_new)
    l_sc[...] = alpha * l_sc[...] + jnp.sum(p, axis=-1, keepdims=True)
    acc_sc[...] = alpha * acc_sc[...] + jnp.dot(
        p.astype(v_ref.dtype), v_ref[...], preferred_element_type=jnp.float32)
    m_sc[...] = m_new

    @pl.when(kv_i == pl.num_programs(3) - 1)
    def _finalize():
        inv_l = pl.reciprocal(l_sc[...], approx=True)   # EUP slot, ~free
        o_ref[...] = (acc_sc[...] * inv_l).astype(o_ref.dtype)


def flash_attention(q, k, v, caq, cbq, cak, cbk, *, causal=False):
    """q, k, v: (B, H, S, D) with q/k in the de-interleaved lane layout."""
    B, H, S, D = q.shape
    block_q = _pick_tile(S, (256, 128))
    block_kv = _pick_tile(S, (256, 128))
    scale = 1.0 / float(D) ** 0.5
    grid = (B, H, S // block_q, S // block_kv)

    kernel = functools.partial(_flash_attn_kernel, scale=scale, eps=1e-6,
                               causal=causal, block_q=block_q, block_kv=block_kv)

    q_spec = pl.BlockSpec((None, None, block_q, D), lambda b, h, i, j: (b, h, i, 0))
    kv_spec = pl.BlockSpec((None, None, block_kv, D), lambda b, h, i, j: (b, h, j, 0))
    rq_spec = pl.BlockSpec((block_q, D), lambda b, h, i, j: (i, 0))
    rk_spec = pl.BlockSpec((block_kv, D), lambda b, h, i, j: (j, 0))

    itemsize = jnp.dtype(q.dtype).itemsize
    cost = pl.CostEstimate(flops=4 * B * H * S * S * D,
                           transcendentals=B * H * S * S,
                           bytes_accessed=4 * B * H * S * D * itemsize)

    return pl.pallas_call(
        kernel,
        out_shape=jax.ShapeDtypeStruct((B, H, S, D), q.dtype),
        grid=grid,
        in_specs=[q_spec, kv_spec, kv_spec, rq_spec, rq_spec, rk_spec, rk_spec],
        out_specs=pl.BlockSpec((None, None, block_q, D), lambda b, h, i, j: (b, h, i, 0)),
        scratch_shapes=[
            pltpu.VMEM((block_q, 1), jnp.float32),    # running max
            pltpu.VMEM((block_q, 1), jnp.float32),    # running denominator
            pltpu.VMEM((block_q, D), jnp.float32),    # output accumulator
            pltpu.VMEM((block_q, D), q.dtype),        # normalized + roped + scaled Q tile
        ],
        compiler_params=_compiler_params(("parallel", "parallel", "parallel", "arbitrary")),
        cost_estimate=cost,
    )(q, k, v, caq, cbq, cak, cbk)


# ---------------------------------------------------------------------------
# RoPE / RMSNorm coefficient tables (host-side, tiny)
# ---------------------------------------------------------------------------

def _rope_rms_tables(freqs_cis, weight_rows, seq_len, head_dim):
    """Fold the per-row RMSNorm weight into de-interleaved RoPE coefficients."""
    f = jnp.asarray(freqs_cis, jnp.float32).reshape(seq_len, head_dim // 2, 2, 2)
    ra = jnp.concatenate([f[:, :, 0, 0], f[:, :, 1, 1]], axis=-1)   # multiplies x
    rb = jnp.concatenate([f[:, :, 0, 1], f[:, :, 1, 0]], axis=-1)   # multiplies rotate_half(x)
    w = _deinterleave_last(weight_rows.astype(jnp.float32))
    half = head_dim // 2
    w_rot = jnp.concatenate([w[:, half:], w[:, :half]], axis=-1)
    return ra * w, rb * w_rot


# ---------------------------------------------------------------------------
# FluxJointAttention forward
# ---------------------------------------------------------------------------

def flux_joint_attention(hidden_states_a, hidden_states_b, image_rotary_emb, params,
                         *, num_heads, head_dim, causal=False, only_out_a=False):
    B, Sa, _ = hidden_states_a.shape
    Sb = hidden_states_b.shape[1]
    H, D = num_heads, head_dim
    S = Sa + Sb

    qkv_a = linear(hidden_states_a, params["a_qkv_w"], params["a_qkv_b"])   # (B, Sa, 3*dim)
    qkv_b = linear(hidden_states_b, params["b_qkv_w"], params["b_qkv_b"])   # (B, Sb, 3*dim)

    # Joint sequence order is [b, a] (matches torch.concat([..._b, ..._a], dim=2)).
    # TODO(synk): the concat + head transpose is plain-JAX layout glue; removing it
    # entirely would need a segment-aware index_map in the attention kernel.
    qkv = jnp.concatenate([qkv_b, qkv_a], axis=1).reshape(B, S, 3, H, D)
    q = qkv[:, :, 0].transpose(0, 2, 1, 3)          # (B, H, S, D)
    k = qkv[:, :, 1].transpose(0, 2, 1, 3)
    v = qkv[:, :, 2].transpose(0, 2, 1, 3)

    # De-interleave Q/K lanes so the in-kernel RoPE is a rotate-half; QK^T is
    # invariant to this shared permutation, V and the output keep the original layout.
    q = _deinterleave_last(q)
    k = _deinterleave_last(k)

    # Per-row RMSNorm weights (segment-b rows then segment-a rows) folded into RoPE.
    wq_rows = jnp.concatenate([jnp.broadcast_to(params["norm_q_b"], (Sb, D)),
                               jnp.broadcast_to(params["norm_q_a"], (Sa, D))], axis=0)
    wk_rows = jnp.concatenate([jnp.broadcast_to(params["norm_k_b"], (Sb, D)),
                               jnp.broadcast_to(params["norm_k_a"], (Sa, D))], axis=0)
    caq, cbq = _rope_rms_tables(image_rotary_emb, wq_rows, S, D)
    cak, cbk = _rope_rms_tables(image_rotary_emb, wk_rows, S, D)

    # TODO(synk): the reference passes causal=True on its flash-attn path, but the
    # fully specified SDPA fallback is non-causal; masking is available via `causal`.
    out = flash_attention(q, k, v, caq, cbq, cak, cbk, causal=causal)       # (B, H, S, D)

    out = out.transpose(0, 2, 1, 3).reshape(B, S, H * D)
    out_b, out_a = out[:, :Sb], out[:, Sb:]

    # TODO(synk): ipadapter cross-attention branch (ipadapter_kwargs_list) and the
    # ulysses sequence-parallel gather/scatter are distributed features not implemented.
    hidden_states_a = linear(out_a, params["a_out_w"], params["a_out_b"])
    if only_out_a:
        return hidden_states_a
    hidden_states_b = linear(out_b, params["b_out_w"], params["b_out_b"])
    return hidden_states_a, hidden_states_b


# ---------------------------------------------------------------------------
# Pure-JAX (XLA) reference for validation
# ---------------------------------------------------------------------------

def _reference_forward(hs_a, hs_b, freqs_cis, params, num_heads, head_dim):
    hp = jax.lax.Precision.HIGHEST
    B, Sa, _ = hs_a.shape
    Sb = hs_b.shape[1]
    H, D = num_heads, head_dim

    def lin(x, w, b):
        return jnp.dot(x, w, precision=hp) + b

    def rms(x, w, eps=1e-6):
        var = jnp.mean(jnp.square(x.astype(jnp.float32)), axis=-1, keepdims=True)
        return (x.astype(jnp.float32) * jax.lax.rsqrt(var + eps)).astype(x.dtype) * w

    qkv_a = lin(hs_a, params["a_qkv_w"], params["a_qkv_b"]).reshape(B, Sa, 3 * H, D).transpose(0, 2, 1, 3)
    q_a, k_a, v_a = qkv_a[:, :H], qkv_a[:, H:2 * H], qkv_a[:, 2 * H:]
    q_a, k_a = rms(q_a, params["norm_q_a"]), rms(k_a, params["norm_k_a"])
    qkv_b = lin(hs_b, params["b_qkv_w"], params["b_qkv_b"]).reshape(B, Sb, 3 * H, D).transpose(0, 2, 1, 3)
    q_b, k_b, v_b = qkv_b[:, :H], qkv_b[:, H:2 * H], qkv_b[:, 2 * H:]
    q_b, k_b = rms(q_b, params["norm_q_b"]), rms(k_b, params["norm_k_b"])

    q = jnp.concatenate([q_b, q_a], axis=2)
    k = jnp.concatenate([k_b, k_a], axis=2)
    v = jnp.concatenate([v_b, v_a], axis=2)

    def rope(x, f):
        xs = x.astype(jnp.float32).reshape(*x.shape[:-1], -1, 1, 2)
        xo = f[..., 0] * xs[..., 0] + f[..., 1] * xs[..., 1]
        return xo.reshape(x.shape).astype(x.dtype)

    q, k = rope(q, freqs_cis), rope(k, freqs_cis)

    s = jnp.einsum("bhqd,bhkd->bhqk", q, k, precision=hp) / jnp.sqrt(jnp.float32(D))
    p = jax.nn.softmax(s, axis=-1)
    o = jnp.einsum("bhqk,bhkd->bhqd", p, v, precision=hp)
    o = o.transpose(0, 2, 1, 3).reshape(B, Sb + Sa, H * D)
    out_b, out_a = o[:, :Sb], o[:, Sb:]
    return (lin(out_a, params["a_out_w"], params["a_out_b"]),
            lin(out_b, params["b_out_w"], params["b_out_b"]))


# ---------------------------------------------------------------------------
# Deterministic parameter init (shapes from the module __init__; (in, out) layout)
# ---------------------------------------------------------------------------

def init_params(key, dim, num_heads, head_dim):
    keys = jax.random.split(key, 12)

    def w(k, shape, scale=0.02):
        return scale * jax.random.normal(k, shape, dtype=jnp.float32)

    return {
        "a_qkv_w": w(keys[0], (dim, 3 * dim)), "a_qkv_b": w(keys[1], (3 * dim,)),
        "b_qkv_w": w(keys[2], (dim, 3 * dim)), "b_qkv_b": w(keys[3], (3 * dim,)),
        "norm_q_a": 1.0 + w(keys[4], (head_dim,)),
        "norm_k_a": 1.0 + w(keys[5], (head_dim,)),
        "norm_q_b": 1.0 + w(keys[6], (head_dim,)),
        "norm_k_b": 1.0 + w(keys[7], (head_dim,)),
        "a_out_w": w(keys[8], (dim, dim)), "a_out_b": w(keys[9], (dim,)),
        "b_out_w": w(keys[10], (dim, dim)), "b_out_b": w(keys[11], (dim,)),
    }


if __name__ == "__main__":
    num_heads, head_dim = 4, 16
    dim = num_heads * head_dim            # 64
    B, Sa, Sb = 2, 16, 8
    S = Sa + Sb

    key = jax.random.PRNGKey(0)
    k1, k2, kp = jax.random.split(key, 3)
    hidden_states_a = jax.random.normal(k1, (B, Sa, dim), dtype=jnp.float32)
    hidden_states_b = jax.random.normal(k2, (B, Sb, dim), dtype=jnp.float32)

    # Rotary embedding table: (1, 1, S, head_dim//2, 2, 2) rotation matrices.
    pos = jnp.arange(S, dtype=jnp.float32)[:, None]
    inv_freq = 1.0 / (10000.0 ** (jnp.arange(head_dim // 2, dtype=jnp.float32)
                                  / (head_dim // 2)))
    ang = pos * inv_freq[None, :]                                       # (S, D/2)
    cos, sin = jnp.cos(ang), jnp.sin(ang)
    image_rotary_emb = jnp.stack(
        [jnp.stack([cos, -sin], axis=-1), jnp.stack([sin, cos], axis=-1)], axis=-2
    )[None, None]                                                       # (1,1,S,D/2,2,2)

    params = init_params(kp, dim, num_heads, head_dim)

    fwd = jax.jit(functools.partial(flux_joint_attention,
                                    num_heads=num_heads, head_dim=head_dim))
    out_a, out_b = fwd(hidden_states_a, hidden_states_b, image_rotary_emb, params)
    jax.block_until_ready((out_a, out_b))

    ref_a, ref_b = _reference_forward(hidden_states_a, hidden_states_b,
                                      image_rotary_emb, params, num_heads, head_dim)

    assert out_a.shape == (B, Sa, dim) and out_b.shape == (B, Sb, dim)
    assert jnp.all(jnp.isfinite(out_a)) and jnp.all(jnp.isfinite(out_b))
    assert jnp.allclose(out_a, ref_a, atol=5e-3, rtol=5e-2)
    assert jnp.allclose(out_b, ref_b, atol=5e-3, rtol=5e-2)
    print("KERNEL_OK")
</pallas_src>

<mosaic_0001>
module attributes {stable_mosaic.version = 11 : i64} {
  func.func @_linear_kernel(%arg0: i32, %arg1: i32, %arg2: i32, %arg3: memref<16x64xf32, #tpu.memory_space<vmem>>, %arg4: memref<64x192xf32, #tpu.memory_space<vmem>>, %arg5: memref<1x192xf32, #tpu.memory_space<vmem>>, %arg6: memref<16x192xf32, #tpu.memory_space<vmem>>, %arg7: memref<16x192xf32, #tpu.memory_space<vmem>>) attributes {dimension_semantics = [#tpu.dimension_semantics<parallel>, #tpu.dimension_semantics<parallel>, #tpu.dimension_semantics<arbitrary>], iteration_bounds = array<i64: 1, 1, 1>, scalar_prefetch = 0 : i64, scratch_operands = 1 : i64, tpu.core_type = #tpu.core_type<tc>, window_params = [{transform_indices = @transform_0, window_bounds = array<i64: 16, 64>}, {transform_indices = @transform_1, window_bounds = array<i64: 64, 192>}, {transform_indices = @transform_2, window_bounds = array<i64: 1, 192>}, {transform_indices = @transform_3, window_bounds = array<i64: 16, 192>}]} {
    %c0_i32 = arith.constant 0 : i32
    %0 = arith.cmpi eq, %arg2, %c0_i32 : i32
    %1 = arith.extui %0 : i1 to i32
    %c0_i32_0 = arith.constant 0 : i32
    %2 = arith.cmpi ne, %1, %c0_i32_0 : i32
    scf.if %2 {
      %cst_10 = arith.constant 0.000000e+00 : f32
      %12 = vector.broadcast %cst_10 : f32 to vector<16x192xf32>
      %c0_11 = arith.constant 0 : index
      %c0_12 = arith.constant 0 : index
      %13 = vector.load %arg7[%c0_11, %c0_12] : memref<16x192xf32, #tpu.memory_space<vmem>>, vector<16x192xf32>
      tpu.vector_store %arg7[%c0_11, %c0_12], %12 {strides = array<i32>} : memref<16x192xf32, #tpu.memory_space<vmem>>, vector<16x192xf32>,
    } else {
    }
    %c0 = arith.constant 0 : index
    %c0_1 = arith.constant 0 : index
    %3 = vector.load %arg7[%c0, %c0_1] : memref<16x192xf32, #tpu.memory_space<vmem>>, vector<16x192xf32>
    %c0_2 = arith.constant 0 : index
    %c0_3 = arith.constant 0 : index
    %4 = vector.load %arg3[%c0_2, %c0_3] : memref<16x64xf32, #tpu.memory_space<vmem>>, vector<16x64xf32>
    %c0_4 = arith.constant 0 : index
    %c0_5 = arith.constant 0 : index
    %5 = vector.load %arg4[%c0_4, %c0_5] : memref<64x192xf32, #tpu.memory_space<vmem>>, vector<64x192xf32>
    %cst = arith.constant dense<0.000000e+00> : vector<16x192xf32>
    %6 = tpu.matmul %4, %5, %cst {dimension_numbers = #tpu.dot_dimension_numbers<[1], [0], [0], [1], [0, 0, 1, 1], [], []>} : vector<16x64xf32>, vector<64x192xf32>, vector<16x192xf32> -> vector<16x192xf32>
    %7 = arith.addf %3, %6 : vector<16x192xf32>
    %c0_6 = arith.constant 0 : index
    %c0_7 = arith.constant 0 : index
    %8 = vector.load %arg7[%c0_6, %c0_7] : memref<16x192xf32, #tpu.memory_space<vmem>>, vector<16x192xf32>
    tpu.vector_store %arg7[%c0_6, %c0_7], %7 {strides = array<i32>} : memref<16x192xf32, #tpu.memory_space<vmem>>, vector<16x192xf32>,
    %c0_i32_8 = arith.constant 0 : i32
    %9 = arith.cmpi eq, %arg2, %c0_i32_8 : i32
    %10 = arith.extui %9 : i1 to i32
    %c0_i32_9 = arith.constant 0 : i32
    %11 = arith.cmpi ne, %10, %c0_i32_9 : i32
    scf.if %11 {
      %c0_10 = arith.constant 0 : index
      %c0_11 = arith.constant 0 : index
      %12 = vector.load %arg7[%c0_10, %c0_11] : memref<16x192xf32, #tpu.memory_space<vmem>>, vector<16x192xf32>
      %c0_12 = arith.constant 0 : index
      %c0_13 = arith.constant 0 : index
      %13 = vector.load %arg5[%c0_12, %c0_13] : memref<1x192xf32, #tpu.memory_space<vmem>>, vector<1x192xf32>
      %14 = vector.broadcast %13 : vector<1x192xf32> to vector<16x192xf32>
      %15 = arith.addf %12, %14 : vector<16x192xf32>
      %c0_14 = arith.constant 0 : index
      %c0_15 = arith.constant 0 : index
      %16 = vector.load %arg6[%c0_14, %c0_15] : memref<16x192xf32, #tpu.memory_space<vmem>>, vector<16x192xf32>
      tpu.vector_store %arg6[%c0_14, %c0_15], %15 {strides = array<i32>} : memref<16x192xf32, #tpu.memory_space<vmem>>, vector<16x192xf32>,
    } else {
    }
    return
  }
  func.func @transform_0(%arg0: i32, %arg1: i32, %arg2: i32) -> (i32, i32) {
    %c0_i32 = arith.constant 0 : i32
    return %arg0, %arg2 : i32, i32
  }
  func.func @transform_1(%arg0: i32, %arg1: i32, %arg2: i32) -> (i32, i32) {
    %c0_i32 = arith.constant 0 : i32
    return %arg2, %arg1 : i32, i32
  }
  func.func @transform_2(%arg0: i32, %arg1: i32, %arg2: i32) -> (i32, i32) {
    %c0_i32 = arith.constant 0 : i32
    %c0_i32_0 = arith.constant 0 : i32
    return %c0_i32, %arg1 : i32, i32
  }
  func.func @transform_3(%arg0: i32, %arg1: i32, %arg2: i32) -> (i32, i32) {
    %c0_i32 = arith.constant 0 : i32
    return %arg0, %arg1 : i32, i32
  }
}

module attributes {stable_mosaic.version = 11 : i64} {
  func.func @_linear_kernel(%arg0: i32, %arg1: i32, %arg2: i32, %arg3: memref<32x64xf32, #tpu.memory_space<vmem>>, %arg4: memref<64x192xf32, #tpu.memory_space<vmem>>, %arg5: memref<1x192xf32, #tpu.memory_space<vmem>>, %arg6: memref<32x192xf32, #tpu.memory_space<vmem>>, %arg7: memref<32x192xf32, #tpu.memory_space<vmem>>) attributes {dimension_semantics = [#tpu.dimension_semantics<parallel>, #tpu.dimension_semantics<parallel>, #tpu.dimension_semantics<arbitrary>], iteration_bounds = array<i64: 1, 1, 1>, scalar_prefetch = 0 : i64, scratch_operands = 1 : i64, tpu.core_type = #tpu.core_type<tc>, window_params = [{transform_indices = @transform_0, window_bounds = array<i64: 32, 64>}, {transform_indices = @transform_1, window_bounds = array<i64: 64, 192>}, {transform_indices = @transform_2, window_bounds = array<i64: 1, 192>}, {transform_indices = @transform_3, window_bounds = array<i64: 32, 192>}]} {
    %c0_i32 = arith.constant 0 : i32
    %0 = arith.cmpi eq, %arg2, %c0_i32 : i32
    %1 = arith.extui %0 : i1 to i32
    %c0_i32_0 = arith.constant 0 : i32
    %2 = arith.cmpi ne, %1, %c0_i32_0 : i32
    scf.if %2 {
      %cst_10 = arith.constant 0.000000e+00 : f32
      %12 = vector.broadcast %cst_10 : f32 to vector<32x192xf32>
      %c0_11 = arith.constant 0 : index
      %c0_12 = arith.constant 0 : index
      %13 = vector.load %arg7[%c0_11, %c0_12] : memref<32x192xf32, #tpu.memory_space<vmem>>, vector<32x192xf32>
      tpu.vector_store %arg7[%c0_11, %c0_12], %12 {strides = array<i32>} : memref<32x192xf32, #tpu.memory_space<vmem>>, vector<32x192xf32>,
    } else {
    }
    %c0 = arith.constant 0 : index
    %c0_1 = arith.constant 0 : index
    %3 = vector.load %arg7[%c0, %c0_1] : memref<32x192xf32, #tpu.memory_space<vmem>>, vector<32x192xf32>
    %c0_2 = arith.constant 0 : index
    %c0_3 = arith.constant 0 : index
    %4 = vector.load %arg3[%c0_2, %c0_3] : memref<32x64xf32, #tpu.memory_space<vmem>>, vector<32x64xf32>
    %c0_4 = arith.constant 0 : index
    %c0_5 = arith.constant 0 : index
    %5 = vector.load %arg4[%c0_4, %c0_5] : memref<64x192xf32, #tpu.memory_space<vmem>>, vector<64x192xf32>
    %cst = arith.constant dense<0.000000e+00> : vector<32x192xf32>
    %6 = tpu.matmul %4, %5, %cst {dimension_numbers = #tpu.dot_dimension_numbers<[1], [0], [0], [1], [0, 0, 1, 1], [], []>} : vector<32x64xf32>, vector<64x192xf32>, vector<32x192xf32> -> vector<32x192xf32>
    %7 = arith.addf %3, %6 : vector<32x192xf32>
    %c0_6 = arith.constant 0 : index
    %c0_7 = arith.constant 0 : index
    %8 = vector.load %arg7[%c0_6, %c0_7] : memref<32x192xf32, #tpu.memory_space<vmem>>, vector<32x192xf32>
    tpu.vector_store %arg7[%c0_6, %c0_7], %7 {strides = array<i32>} : memref<32x192xf32, #tpu.memory_space<vmem>>, vector<32x192xf32>,
    %c0_i32_8 = arith.constant 0 : i32
    %9 = arith.cmpi eq, %arg2, %c0_i32_8 : i32
    %10 = arith.extui %9 : i1 to i32
    %c0_i32_9 = arith.constant 0 : i32
    %11 = arith.cmpi ne, %10, %c0_i32_9 : i32
    scf.if %11 {
      %c0_10 = arith.constant 0 : index
      %c0_11 = arith.constant 0 : index
      %12 = vector.load %arg7[%c0_10, %c0_11] : memref<32x192xf32, #tpu.memory_space<vmem>>, vector<32x192xf32>
      %c0_12 = arith.constant 0 : index
      %c0_13 = arith.constant 0 : index
      %13 = vector.load %arg5[%c0_12, %c0_13] : memref<1x192xf32, #tpu.memory_space<vmem>>, vector<1x192xf32>
      %14 = vector.broadcast %13 : vector<1x192xf32> to vector<32x192xf32>
      %15 = arith.addf %12, %14 : vector<32x192xf32>
      %c0_14 = arith.constant 0 : index
      %c0_15 = arith.constant 0 : index
      %16 = vector.load %arg6[%c0_14, %c0_15] : memref<32x192xf32, #tpu.memory_space<vmem>>, vector<32x192xf32>
      tpu.vector_store %arg6[%c0_14, %c0_15], %15 {strides = array<i32>} : memref<32x192xf32, #tpu.memory_space<vmem>>, vector<32x192xf32>,
    } else {
    }
    return
  }
  func.func @transform_0(%arg0: i32, %arg1: i32, %arg2: i32) -> (i32, i32) {
    %c0_i32 = arith.constant 0 : i32
    return %arg0, %arg2 : i32, i32
  }
  func.func @transform_1(%arg0: i32, %arg1: i32, %arg2: i32) -> (i32, i32) {
    %c0_i32 = arith.constant 0 : i32
    return %arg2, %arg1 : i32, i32
  }
  func.func @transform_2(%arg0: i32, %arg1: i32, %arg2: i32) -> (i32, i32) {
    %c0_i32 = arith.constant 0 : i32
    %c0_i32_0 = arith.constant 0 : i32
    return %c0_i32, %arg1 : i32, i32
  }
  func.func @transform_3(%arg0: i32, %arg1: i32, %arg2: i32) -> (i32, i32) {
    %c0_i32 = arith.constant 0 : i32
    return %arg0, %arg1 : i32, i32
  }
}

module attributes {stable_mosaic.version = 11 : i64} {
  func.func @_flash_attn_kernel(%arg0: i32, %arg1: i32, %arg2: i32, %arg3: i32, %arg4: memref<1x1x24x16xf32, #tpu.memory_space<vmem>>, %arg5: memref<1x1x24x16xf32, #tpu.memory_space<vmem>>, %arg6: memref<1x1x24x16xf32, #tpu.memory_space<vmem>>, %arg7: memref<24x16xf32, #tpu.memory_space<vmem>>, %arg8: memref<24x16xf32, #tpu.memory_space<vmem>>, %arg9: memref<24x16xf32, #tpu.memory_space<vmem>>, %arg10: memref<24x16xf32, #tpu.memory_space<vmem>>, %arg11: memref<1x1x24x16xf32, #tpu.memory_space<vmem>>, %arg12: memref<24x1xf32, #tpu.memory_space<vmem>>, %arg13: memref<24x1xf32, #tpu.memory_space<vmem>>, %arg14: memref<24x16xf32, #tpu.memory_space<vmem>>, %arg15: memref<24x16xf32, #tpu.memory_space<vmem>>) attributes {dimension_semantics = [#tpu.dimension_semantics<parallel>, #tpu.dimension_semantics<parallel>, #tpu.dimension_semantics<parallel>, #tpu.dimension_semantics<arbitrary>], iteration_bounds = array<i64: 2, 4, 1, 1>, scalar_prefetch = 0 : i64, scratch_operands = 4 : i64, tpu.core_type = #tpu.core_type<tc>, window_params = [{transform_indices = @transform_0, window_bounds = array<i64: 1, 1, 24, 16>}, {transform_indices = @transform_1, window_bounds = array<i64: 1, 1, 24, 16>}, {transform_indices = @transform_2, window_bounds = array<i64: 1, 1, 24, 16>}, {transform_indices = @transform_3, window_bounds = array<i64: 24, 16>}, {transform_indices = @transform_4, window_bounds = array<i64: 24, 16>}, {transform_indices = @transform_5, window_bounds = array<i64: 24, 16>}, {transform_indices = @transform_6, window_bounds = array<i64: 24, 16>}, {transform_indices = @transform_7, window_bounds = array<i64: 1, 1, 24, 16>}]} {
    %c0_i32 = arith.constant 0 : i32
    %0 = arith.cmpi eq, %arg3, %c0_i32 : i32
    %1 = arith.extui %0 : i1 to i32
    %c0_i32_0 = arith.constant 0 : i32
    %2 = arith.cmpi ne, %1, %c0_i32_0 : i32
    scf.if %2 {
      %c0_34 = arith.constant 0 : index
      %c0_35 = arith.constant 0 : index
      %c0_36 = arith.constant 0 : index
      %c0_37 = arith.constant 0 : index
      %52 = vector.load %arg4[%c0_34, %c0_35, %c0_36, %c0_37] : memref<1x1x24x16xf32, #tpu.memory_space<vmem>>, vector<1x1x24x16xf32>
      %53 = vector.shape_cast %52 : vector<1x1x24x16xf32> to vector<24x16xf32>
      %c0_38 = arith.constant 0 : index
      %c0_39 = arith.constant 0 : index
      %54 = vector.load %arg7[%c0_38, %c0_39] : memref<24x16xf32, #tpu.memory_space<vmem>>, vector<24x16xf32>
      %c0_40 = arith.constant 0 : index
      %c0_41 = arith.constant 0 : index
      %55 = vector.load %arg8[%c0_40, %c0_41] : memref<24x16xf32, #tpu.memory_space<vmem>>, vector<24x16xf32>
      %56 = arith.mulf %53, %53 : vector<24x16xf32>
      %cst_42 = arith.constant dense<0.000000e+00> : vector<24xf32>
      %57 = vector.multi_reduction <add>, %56, %cst_42 [1] : vector<24x16xf32> to vector<24xf32>
      %58 = vector.shape_cast %57 : vector<24xf32> to vector<24x1xf32>
      %cst_43 = arith.constant 1.600000e+01 : f32
      %59 = vector.broadcast %cst_43 : f32 to vector<24x1xf32>
      %60 = arith.divf %58, %59 : vector<24x1xf32>
      %cst_44 = arith.constant 9.99999997E-7 : f32
      %61 = vector.broadcast %cst_44 : f32 to vector<24x1xf32>
      %62 = arith.addf %60, %61 : vector<24x1xf32>
      %63 = math.rsqrt %62 : vector<24x1xf32>
      %64 = vector.broadcast %63 : vector<24x1xf32> to vector<24x16xf32>
      %65 = arith.mulf %53, %64 : vector<24x16xf32>
      %66 = vector.extract_strided_slice %65 {offsets = [0, 8], sizes = [24, 8], strides = [1, 1]} : vector<24x16xf32> to vector<24x8xf32>
      %67 = vector.extract_strided_slice %65 {offsets = [0, 0], sizes = [24, 8], strides = [1, 1]} : vector<24x16xf32> to vector<24x8xf32>
      %68 = tpu.concatenate %66, %67 in 1 : vector<24x8xf32>, vector<24x8xf32> -> vector<24x16xf32>
      %69 = arith.mulf %54, %65 : vector<24x16xf32>
      %70 = arith.mulf %55, %68 : vector<24x16xf32>
      %71 = arith.addf %69, %70 : vector<24x16xf32>
      %cst_45 = arith.constant 2.500000e-01 : f32
      %72 = vector.broadcast %cst_45 : f32 to vector<24x16xf32>
      %73 = arith.mulf %71, %72 : vector<24x16xf32>
      %c0_46 = arith.constant 0 : index
      %c0_47 = arith.constant 0 : index
      %74 = vector.load %arg15[%c0_46, %c0_47] : memref<24x16xf32, #tpu.memory_space<vmem>>, vector<24x16xf32>
      tpu.vector_store %arg15[%c0_46, %c0_47], %73 {strides = array<i32>} : memref<24x16xf32, #tpu.memory_space<vmem>>, vector<24x16xf32>,
      %cst_48 = arith.constant 0xFF800000 : f32
      %75 = vector.broadcast %cst_48 : f32 to vector<24x1xf32>
      %c0_49 = arith.constant 0 : index
      %c0_50 = arith.constant 0 : index
      %76 = vector.load %arg12[%c0_49, %c0_50] : memref<24x1xf32, #tpu.memory_space<vmem>>, vector<24x1xf32>
      tpu.vector_store %arg12[%c0_49, %c0_50], %75 {strides = array<i32>} : memref<24x1xf32, #tpu.memory_space<vmem>>, vector<24x1xf32>,
      %cst_51 = arith.constant 0.000000e+00 : f32
      %77 = vector.broadcast %cst_51 : f32 to vector<24x1xf32>
      %c0_52 = arith.constant 0 : index
      %c0_53 = arith.constant 0 : index
      %78 = vector.load %arg13[%c0_52, %c0_53] : memref<24x1xf32, #tpu.memory_space<vmem>>, vector<24x1xf32>
      tpu.vector_store %arg13[%c0_52, %c0_53], %77 {strides = array<i32>} : memref<24x1xf32, #tpu.memory_space<vmem>>, vector<24x1xf32>,
      %cst_54 = arith.constant 0.000000e+00 : f32
      %79 = vector.broadcast %cst_54 : f32 to vector<24x16xf32>
      %c0_55 = arith.constant 0 : index
      %c0_56 = arith.constant 0 : index
      %80 = vector.load %arg14[%c0_55, %c0_56] : memref<24x16xf32, #tpu.memory_space<vmem>>, vector<24x16xf32>
      tpu.vector_store %arg14[%c0_55, %c0_56], %79 {strides = array<i32>} : memref<24x16xf32, #tpu.memory_space<vmem>>, vector<24x16xf32>,
    } else {
    }
    %c0 = arith.constant 0 : index
    %c0_1 = arith.constant 0 : index
    %c0_2 = arith.constant 0 : index
    %c0_3 = arith.constant 0 : index
    %3 = vector.load %arg5[%c0, %c0_1, %c0_2, %c0_3] : memref<1x1x24x16xf32, #tpu.memory_space<vmem>>, vector<1x1x24x16xf32>
    %4 = vector.shape_cast %3 : vector<1x1x24x16xf32> to vector<24x16xf32>
    %c0_4 = arith.constant 0 : index
    %c0_5 = arith.constant 0 : index
    %5 = vector.load %arg9[%c0_4, %c0_5] : memref<24x16xf32, #tpu.memory_space<vmem>>, vector<24x16xf32>
    %c0_6 = arith.constant 0 : index
    %c0_7 = arith.constant 0 : index
    %6 = vector.load %arg10[%c0_6, %c0_7] : memref<24x16xf32, #tpu.memory_space<vmem>>, vector<24x16xf32>
    %7 = arith.mulf %4, %4 : vector<24x16xf32>
    %cst = arith.constant dense<0.000000e+00> : vector<24xf32>
    %8 = vector.multi_reduction <add>, %7, %cst [1] : vector<24x16xf32> to vector<24xf32>
    %9 = vector.shape_cast %8 : vector<24xf32> to vector<24x1xf32>
    %cst_8 = arith.constant 1.600000e+01 : f32
    %10 = vector.broadcast %cst_8 : f32 to vector<24x1xf32>
    %11 = arith.divf %9, %10 : vector<24x1xf32>
    %cst_9 = arith.constant 9.99999997E-7 : f32
    %12 = vector.broadcast %cst_9 : f32 to vector<24x1xf32>
    %13 = arith.addf %11, %12 : vector<24x1xf32>
    %14 = math.rsqrt %13 : vector<24x1xf32>
    %15 = vector.broadcast %14 : vector<24x1xf32> to vector<24x16xf32>
    %16 = arith.mulf %4, %15 : vector<24x16xf32>
    %17 = vector.extract_strided_slice %16 {offsets = [0, 8], sizes = [24, 8], strides = [1, 1]} : vector<24x16xf32> to vector<24x8xf32>
    %18 = vector.extract_strided_slice %16 {offsets = [0, 0], sizes = [24, 8], strides = [1, 1]} : vector<24x16xf32> to vector<24x8xf32>
    %19 = tpu.concatenate %17, %18 in 1 : vector<24x8xf32>, vector<24x8xf32> -> vector<24x16xf32>
    %20 = arith.mulf %5, %16 : vector<24x16xf32>
    %21 = arith.mulf %6, %19 : vector<24x16xf32>
    %22 = arith.addf %20, %21 : vector<24x16xf32>
    %c0_10 = arith.constant 0 : index
    %c0_11 = arith.constant 0 : index
    %23 = vector.load %arg15[%c0_10, %c0_11] : memref<24x16xf32, #tpu.memory_space<vmem>>, vector<24x16xf32>
    %cst_12 = arith.constant dense<0.000000e+00> : vector<24x24xf32>
    %24 = tpu.matmul %23, %22, %cst_12 {dimension_numbers = #tpu.dot_dimension_numbers<[1], [1], [0], [0], [0, 0, 1, 0], [], []>} : vector<24x16xf32>, vector<24x16xf32>, vector<24x24xf32> -> vector<24x24xf32>
    %c0_13 = arith.constant 0 : index
    %c0_14 = arith.constant 0 : index
    %25 = vector.load %arg12[%c0_13, %c0_14] : memref<24x1xf32, #tpu.memory_space<vmem>>, vector<24x1xf32>
    %cst_15 = arith.constant dense<0xFF800000> : vector<24xf32>
    %26 = vector.multi_reduction <maximumf>, %24, %cst_15 [1] : vector<24x24xf32> to vector<24xf32>
    %27 = vector.shape_cast %26 : vector<24xf32> to vector<24x1xf32>
    %28 = arith.maximumf %25, %27 : vector<24x1xf32>
    %29 = arith.subf %25, %28 : vector<24x1xf32>
    %30 = math.exp %29 : vector<24x1xf32>
    %31 = vector.broadcast %28 : vector<24x1xf32> to vector<24x24xf32>
    %32 = arith.subf %24, %31 : vector<24x24xf32>
    %33 = math.exp %32 : vector<24x24xf32>
    %c0_16 = arith.constant 0 : index
    %c0_17 = arith.constant 0 : index
    %34 = vector.load %arg13[%c0_16, %c0_17] : memref<24x1xf32, #tpu.memory_space<vmem>>, vector<24x1xf32>
    %35 = arith.mulf %30, %34 : vector<24x1xf32>
    %cst_18 = arith.constant dense<0.000000e+00> : vector<24xf32>
    %36 = vector.multi_reduction <add>, %33, %cst_18 [1] : vector<24x24xf32> to vector<24xf32>
    %37 = vector.shape_cast %36 : vector<24xf32> to vector<24x1xf32>
    %38 = arith.addf %35, %37 : vector<24x1xf32>
    %c0_19 = arith.constant 0 : index
    %c0_20 = arith.constant 0 : index
    %39 = vector.load %arg13[%c0_19, %c0_20] : memref<24x1xf32, #tpu.memory_space<vmem>>, vector<24x1xf32>
    tpu.vector_store %arg13[%c0_19, %c0_20], %38 {strides = array<i32>} : memref<24x1xf32, #tpu.memory_space<vmem>>, vector<24x1xf32>,
    %c0_21 = arith.constant 0 : index
    %c0_22 = arith.constant 0 : index
    %40 = vector.load %arg14[%c0_21, %c0_22] : memref<24x16xf32, #tpu.memory_space<vmem>>, vector<24x16xf32>
    %41 = vector.broadcast %30 : vector<24x1xf32> to vector<24x16xf32>
    %42 = arith.mulf %41, %40 : vector<24x16xf32>
    %c0_23 = arith.constant 0 : index
    %c0_24 = arith.constant 0 : index
    %c0_25 = arith.constant 0 : index
    %c0_26 = arith.constant 0 : index
    %43 = vector.load %arg6[%c0_23, %c0_24, %c0_25, %c0_26] : memref<1x1x24x16xf32, #tpu.memory_space<vmem>>, vector<1x1x24x16xf32>
    %44 = vector.shape_cast %43 : vector<1x1x24x16xf32> to vector<24x16xf32>
    %cst_27 = arith.constant dense<0.000000e+00> : vector<24x16xf32>
    %45 = tpu.matmul %33, %44, %cst_27 {dimension_numbers = #tpu.dot_dimension_numbers<[1], [0], [0], [1], [0, 0, 1, 1], [], []>} : vector<24x24xf32>, vector<24x16xf32>, vector<24x16xf32> -> vector<24x16xf32>
    %46 = arith.addf %42, %45 : vector<24x16xf32>
    %c0_28 = arith.constant 0 : index
    %c0_29 = arith.constant 0 : index
    %47 = vector.load %arg14[%c0_28, %c0_29] : memref<24x16xf32, #tpu.memory_space<vmem>>, vector<24x16xf32>
    tpu.vector_store %arg14[%c0_28, %c0_29], %46 {strides = array<i32>} : memref<24x16xf32, #tpu.memory_space<vmem>>, vector<24x16xf32>,
    %c0_30 = arith.constant 0 : index
    %c0_31 = arith.constant 0 : index
    %48 = vector.load %arg12[%c0_30, %c0_31] : memref<24x1xf32, #tpu.memory_space<vmem>>, vector<24x1xf32>
    tpu.vector_store %arg12[%c0_30, %c0_31], %28 {strides = array<i32>} : memref<24x1xf32, #tpu.memory_space<vmem>>, vector<24x1xf32>,
    %c0_i32_32 = arith.constant 0 : i32
    %49 = arith.cmpi eq, %arg3, %c0_i32_32 : i32
    %50 = arith.extui %49 : i1 to i32
    %c0_i32_33 = arith.constant 0 : i32
    %51 = arith.cmpi ne, %50, %c0_i32_33 : i32
    scf.if %51 {
      %c0_34 = arith.constant 0 : index
      %c0_35 = arith.constant 0 : index
      %52 = vector.load %arg13[%c0_34, %c0_35] : memref<24x1xf32, #tpu.memory_space<vmem>>, vector<24x1xf32>
      %53 = tpu.reciprocal %52 {approx = true} : vector<24x1xf32> -> vector<24x1xf32>
      %c0_36 = arith.constant 0 : index
      %c0_37 = arith.constant 0 : index
      %54 = vector.load %arg14[%c0_36, %c0_37] : memref<24x16xf32, #tpu.memory_space<vmem>>, vector<24x16xf32>
      %55 = vector.broadcast %53 : vector<24x1xf32> to vector<24x16xf32>
      %56 = arith.mulf %54, %55 : vector<24x16xf32>
      %c0_38 = arith.constant 0 : index
      %c0_39 = arith.constant 0 : index
      %c0_40 = arith.constant 0 : index
      %c0_41 = arith.constant 0 : index
      %57 = vector.load %arg11[%c0_38, %c0_39, %c0_40, %c0_41] : memref<1x1x24x16xf32, #tpu.memory_space<vmem>>, vector<1x1x24x16xf32>
      %58 = vector.shape_cast %57 : vector<1x1x24x16xf32> to vector<24x16xf32>
      %59 = vector.shape_cast %56 : vector<24x16xf32> to vector<1x1x24x16xf32>
      tpu.vector_store %arg11[%c0_38, %c0_39, %c0_40, %c0_41], %59 {strides = array<i32>} : memref<1x1x24x16xf32, #tpu.memory_space<vmem>>, vector<1x1x24x16xf32>,
    } else {
    }
    return
  }
  func.func @transform_0(%arg0: i32, %arg1: i32, %arg2: i32, %arg3: i32) -> (i32, i32, i32, i32) {
    %c0_i32 = arith.constant 0 : i32
    %c0_i32_0 = arith.constant 0 : i32
    return %arg0, %arg1, %arg2, %c0_i32 : i32, i32, i32, i32
  }
  func.func @transform_1(%arg0: i32, %arg1: i32, %arg2: i32, %arg3: i32) -> (i32, i32, i32, i32) {
    %c0_i32 = arith.constant 0 : i32
    %c0_i32_0 = arith.constant 0 : i32
    return %arg0, %arg1, %arg3, %c0_i32 : i32, i32, i32, i32
  }
  func.func @transform_2(%arg0: i32, %arg1: i32, %arg2: i32, %arg3: i32) -> (i32, i32, i32, i32) {
    %c0_i32 = arith.constant 0 : i32
    %c0_i32_0 = arith.constant 0 : i32
    return %arg0, %arg1, %arg3, %c0_i32 : i32, i32, i32, i32
  }
  func.func @transform_3(%arg0: i32, %arg1: i32, %arg2: i32, %arg3: i32) -> (i32, i32) {
    %c0_i32 = arith.constant 0 : i32
    %c0_i32_0 = arith.constant 0 : i32
    return %arg2, %c0_i32 : i32, i32
  }
  func.func @transform_4(%arg0: i32, %arg1: i32, %arg2: i32, %arg3: i32) -> (i32, i32) {
    %c0_i32 = arith.constant 0 : i32
    %c0_i32_0 = arith.constant 0 : i32
    return %arg2, %c0_i32 : i32, i32
  }
  func.func @transform_5(%arg0: i32, %arg1: i32, %arg2: i32, %arg3: i32) -> (i32, i32) {
    %c0_i32 = arith.constant 0 : i32
    %c0_i32_0 = arith.constant 0 : i32
    return %arg3, %c0_i32 : i32, i32
  }
  func.func @transform_6(%arg0: i32, %arg1: i32, %arg2: i32, %arg3: i32) -> (i32, i32) {
    %c0_i32 = arith.constant 0 : i32
    %c0_i32_0 = arith.constant 0 : i32
    return %arg3, %c0_i32 : i32, i32
  }
  func.func @transform_7(%arg0: i32, %arg1: i32, %arg2: i32, %arg3: i32) -> (i32, i32, i32, i32) {
    %c0_i32 = arith.constant 0 : i32
    %c0_i32_0 = arith.constant 0 : i32
    return %arg0, %arg1, %arg2, %c0_i32 : i32, i32, i32, i32
  }
}

module attributes {stable_mosaic.version = 11 : i64} {
  func.func @_linear_kernel(%arg0: i32, %arg1: i32, %arg2: i32, %arg3: memref<32x64xf32, #tpu.memory_space<vmem>>, %arg4: memref<64x64xf32, #tpu.memory_space<vmem>>, %arg5: memref<1x64xf32, #tpu.memory_space<vmem>>, %arg6: memref<32x64xf32, #tpu.memory_space<vmem>>, %arg7: memref<32x64xf32, #tpu.memory_space<vmem>>) attributes {dimension_semantics = [#tpu.dimension_semantics<parallel>, #tpu.dimension_semantics<parallel>, #tpu.dimension_semantics<arbitrary>], iteration_bounds = array<i64: 1, 1, 1>, scalar_prefetch = 0 : i64, scratch_operands = 1 : i64, tpu.core_type = #tpu.core_type<tc>, window_params = [{transform_indices = @transform_0, window_bounds = array<i64: 32, 64>}, {transform_indices = @transform_1, window_bounds = array<i64: 64, 64>}, {transform_indices = @transform_2, window_bounds = array<i64: 1, 64>}, {transform_indices = @transform_3, window_bounds = array<i64: 32, 64>}]} {
    %c0_i32 = arith.constant 0 : i32
    %0 = arith.cmpi eq, %arg2, %c0_i32 : i32
    %1 = arith.extui %0 : i1 to i32
    %c0_i32_0 = arith.constant 0 : i32
    %2 = arith.cmpi ne, %1, %c0_i32_0 : i32
    scf.if %2 {
      %cst_10 = arith.constant 0.000000e+00 : f32
      %12 = vector.broadcast %cst_10 : f32 to vector<32x64xf32>
      %c0_11 = arith.constant 0 : index
      %c0_12 = arith.constant 0 : index
      %13 = vector.load %arg7[%c0_11, %c0_12] : memref<32x64xf32, #tpu.memory_space<vmem>>, vector<32x64xf32>
      tpu.vector_store %arg7[%c0_11, %c0_12], %12 {strides = array<i32>} : memref<32x64xf32, #tpu.memory_space<vmem>>, vector<32x64xf32>,
    } else {
    }
    %c0 = arith.constant 0 : index
    %c0_1 = arith.constant 0 : index
    %3 = vector.load %arg7[%c0, %c0_1] : memref<32x64xf32, #tpu.memory_space<vmem>>, vector<32x64xf32>
    %c0_2 = arith.constant 0 : index
    %c0_3 = arith.constant 0 : index
    %4 = vector.load %arg3[%c0_2, %c0_3] : memref<32x64xf32, #tpu.memory_space<vmem>>, vector<32x64xf32>
    %c0_4 = arith.constant 0 : index
    %c0_5 = arith.constant 0 : index
    %5 = vector.load %arg4[%c0_4, %c0_5] : memref<64x64xf32, #tpu.memory_space<vmem>>, vector<64x64xf32>
    %cst = arith.constant dense<0.000000e+00> : vector<32x64xf32>
    %6 = tpu.matmul %4, %5, %cst {dimension_numbers = #tpu.dot_dimension_numbers<[1], [0], [0], [1], [0, 0, 1, 1], [], []>} : vector<32x64xf32>, vector<64x64xf32>, vector<32x64xf32> -> vector<32x64xf32>
    %7 = arith.addf %3, %6 : vector<32x64xf32>
    %c0_6 = arith.constant 0 : index
    %c0_7 = arith.constant 0 : index
    %8 = vector.load %arg7[%c0_6, %c0_7] : memref<32x64xf32, #tpu.memory_space<vmem>>, vector<32x64xf32>
    tpu.vector_store %arg7[%c0_6, %c0_7], %7 {strides = array<i32>} : memref<32x64xf32, #tpu.memory_space<vmem>>, vector<32x64xf32>,
    %c0_i32_8 = arith.constant 0 : i32
    %9 = arith.cmpi eq, %arg2, %c0_i32_8 : i32
    %10 = arith.extui %9 : i1 to i32
    %c0_i32_9 = arith.constant 0 : i32
    %11 = arith.cmpi ne, %10, %c0_i32_9 : i32
    scf.if %11 {
      %c0_10 = arith.constant 0 : index
      %c0_11 = arith.constant 0 : index
      %12 = vector.load %arg7[%c0_10, %c0_11] : memref<32x64xf32, #tpu.memory_space<vmem>>, vector<32x64xf32>
      %c0_12 = arith.constant 0 : index
      %c0_13 = arith.constant 0 : index
      %13 = vector.load %arg5[%c0_12, %c0_13] : memref<1x64xf32, #tpu.memory_space<vmem>>, vector<1x64xf32>
      %14 = vector.broadcast %13 : vector<1x64xf32> to vector<32x64xf32>
      %15 = arith.addf %12, %14 : vector<32x64xf32>
      %c0_14 = arith.constant 0 : index
      %c0_15 = arith.constant 0 : index
      %16 = vector.load %arg6[%c0_14, %c0_15] : memref<32x64xf32, #tpu.memory_space<vmem>>, vector<32x64xf32>
      tpu.vector_store %arg6[%c0_14, %c0_15], %15 {strides = array<i32>} : memref<32x64xf32, #tpu.memory_space<vmem>>, vector<32x64xf32>,
    } else {
    }
    return
  }
  func.func @transform_0(%arg0: i32, %arg1: i32, %arg2: i32) -> (i32, i32) {
    %c0_i32 = arith.constant 0 : i32
    return %arg0, %arg2 : i32, i32
  }
  func.func @transform_1(%arg0: i32, %arg1: i32, %arg2: i32) -> (i32, i32) {
    %c0_i32 = arith.constant 0 : i32
    return %arg2, %arg1 : i32, i32
  }
  func.func @transform_2(%arg0: i32, %arg1: i32, %arg2: i32) -> (i32, i32) {
    %c0_i32 = arith.constant 0 : i32
    %c0_i32_0 = arith.constant 0 : i32
    return %c0_i32, %arg1 : i32, i32
  }
  func.func @transform_3(%arg0: i32, %arg1: i32, %arg2: i32) -> (i32, i32) {
    %c0_i32 = arith.constant 0 : i32
    return %arg0, %arg1 : i32, i32
  }
}

module attributes {stable_mosaic.version = 11 : i64} {
  func.func @_linear_kernel(%arg0: i32, %arg1: i32, %arg2: i32, %arg3: memref<16x64xf32, #tpu.memory_space<vmem>>, %arg4: memref<64x64xf32, #tpu.memory_space<vmem>>, %arg5: memref<1x64xf32, #tpu.memory_space<vmem>>, %arg6: memref<16x64xf32, #tpu.memory_space<vmem>>, %arg7: memref<16x64xf32, #tpu.memory_space<vmem>>) attributes {dimension_semantics = [#tpu.dimension_semantics<parallel>, #tpu.dimension_semantics<parallel>, #tpu.dimension_semantics<arbitrary>], iteration_bounds = array<i64: 1, 1, 1>, scalar_prefetch = 0 : i64, scratch_operands = 1 : i64, tpu.core_type = #tpu.core_type<tc>, window_params = [{transform_indices = @transform_0, window_bounds = array<i64: 16, 64>}, {transform_indices = @transform_1, window_bounds = array<i64: 64, 64>}, {transform_indices = @transform_2, window_bounds = array<i64: 1, 64>}, {transform_indices = @transform_3, window_bounds = array<i64: 16, 64>}]} {
    %c0_i32 = arith.constant 0 : i32
    %0 = arith.cmpi eq, %arg2, %c0_i32 : i32
    %1 = arith.extui %0 : i1 to i32
    %c0_i32_0 = arith.constant 0 : i32
    %2 = arith.cmpi ne, %1, %c0_i32_0 : i32
    scf.if %2 {
      %cst_10 = arith.constant 0.000000e+00 : f32
      %12 = vector.broadcast %cst_10 : f32 to vector<16x64xf32>
      %c0_11 = arith.constant 0 : index
      %c0_12 = arith.constant 0 : index
      %13 = vector.load %arg7[%c0_11, %c0_12] : memref<16x64xf32, #tpu.memory_space<vmem>>, vector<16x64xf32>
      tpu.vector_store %arg7[%c0_11, %c0_12], %12 {strides = array<i32>} : memref<16x64xf32, #tpu.memory_space<vmem>>, vector<16x64xf32>,
    } else {
    }
    %c0 = arith.constant 0 : index
    %c0_1 = arith.constant 0 : index
    %3 = vector.load %arg7[%c0, %c0_1] : memref<16x64xf32, #tpu.memory_space<vmem>>, vector<16x64xf32>
    %c0_2 = arith.constant 0 : index
    %c0_3 = arith.constant 0 : index
    %4 = vector.load %arg3[%c0_2, %c0_3] : memref<16x64xf32, #tpu.memory_space<vmem>>, vector<16x64xf32>
    %c0_4 = arith.constant 0 : index
    %c0_5 = arith.constant 0 : index
    %5 = vector.load %arg4[%c0_4, %c0_5] : memref<64x64xf32, #tpu.memory_space<vmem>>, vector<64x64xf32>
    %cst = arith.constant dense<0.000000e+00> : vector<16x64xf32>
    %6 = tpu.matmul %4, %5, %cst {dimension_numbers = #tpu.dot_dimension_numbers<[1], [0], [0], [1], [0, 0, 1, 1], [], []>} : vector<16x64xf32>, vector<64x64xf32>, vector<16x64xf32> -> vector<16x64xf32>
    %7 = arith.addf %3, %6 : vector<16x64xf32>
    %c0_6 = arith.constant 0 : index
    %c0_7 = arith.constant 0 : index
    %8 = vector.load %arg7[%c0_6, %c0_7] : memref<16x64xf32, #tpu.memory_space<vmem>>, vector<16x64xf32>
    tpu.vector_store %arg7[%c0_6, %c0_7], %7 {strides = array<i32>} : memref<16x64xf32, #tpu.memory_space<vmem>>, vector<16x64xf32>,
    %c0_i32_8 = arith.constant 0 : i32
    %9 = arith.cmpi eq, %arg2, %c0_i32_8 : i32
    %10 = arith.extui %9 : i1 to i32
    %c0_i32_9 = arith.constant 0 : i32
    %11 = arith.cmpi ne, %10, %c0_i32_9 : i32
    scf.if %11 {
      %c0_10 = arith.constant 0 : index
      %c0_11 = arith.constant 0 : index
      %12 = vector.load %arg7[%c0_10, %c0_11] : memref<16x64xf32, #tpu.memory_space<vmem>>, vector<16x64xf32>
      %c0_12 = arith.constant 0 : index
      %c0_13 = arith.constant 0 : index
      %13 = vector.load %arg5[%c0_12, %c0_13] : memref<1x64xf32, #tpu.memory_space<vmem>>, vector<1x64xf32>
      %14 = vector.broadcast %13 : vector<1x64xf32> to vector<16x64xf32>
      %15 = arith.addf %12, %14 : vector<16x64xf32>
      %c0_14 = arith.constant 0 : index
      %c0_15 = arith.constant 0 : index
      %16 = vector.load %arg6[%c0_14, %c0_15] : memref<16x64xf32, #tpu.memory_space<vmem>>, vector<16x64xf32>
      tpu.vector_store %arg6[%c0_14, %c0_15], %15 {strides = array<i32>} : memref<16x64xf32, #tpu.memory_space<vmem>>, vector<16x64xf32>,
    } else {
    }
    return
  }
  func.func @transform_0(%arg0: i32, %arg1: i32, %arg2: i32) -> (i32, i32) {
    %c0_i32 = arith.constant 0 : i32
    return %arg0, %arg2 : i32, i32
  }
  func.func @transform_1(%arg0: i32, %arg1: i32, %arg2: i32) -> (i32, i32) {
    %c0_i32 = arith.constant 0 : i32
    return %arg2, %arg1 : i32, i32
  }
  func.func @transform_2(%arg0: i32, %arg1: i32, %arg2: i32) -> (i32, i32) {
    %c0_i32 = arith.constant 0 : i32
    %c0_i32_0 = arith.constant 0 : i32
    return %c0_i32, %arg1 : i32, i32
  }
  func.func @transform_3(%arg0: i32, %arg1: i32, %arg2: i32) -> (i32, i32) {
    %c0_i32 = arith.constant 0 : i32
    return %arg0, %arg1 : i32, i32
  }
}

</mosaic_0001>

<llo_original>
// kernel: flux_joint_attention.6
$region0: #{flux_joint_attention.6}
  #allocation0 [shape = 'u32[]', space=smem, size = 0x4, offset = 0x4, fixed_abs, tag = 'smem constant byte address 0x4 - core index']
  #allocation1 [shape = 'u32[72,128]{1,0:T(1,128)}', space=vmem, size = 0x9000, scoped, tag = 'internal scratch']
  #allocation2 [shape = 'f32[16,192]{1,0:T(8,128)}', space=vmem, size = 0x4000, scoped, tag = 'scratch operand']
  %s0 = inlined_call_operand.hbm [shape: f32[16,64], index: 0, kind: input, shape index: {}]
  %s1 = inlined_call_operand.hbm [shape: f32[64,192], index: 1, kind: input, shape index: {}]
  %s2 = inlined_call_operand.vmem [shape: f32[1,192], index: 2, kind: input, shape index: {}]
  %s3 = inlined_call_operand.vmem [shape: f32[16,192], index: 3, kind: output, shape index: {}]
  %s4 = sld [smem:[#allocation0]]
  $region38: #{flux_joint_attention.6} parent=0
    _
  %s6 = ssub.s32 1, %s4
  %s7 = scalar_select 0, %s6, %s4
  $region1: #{flux_joint_attention.6} parent=0
    #allocation3 [shape = 'u8[8192]{0}', space=vmem, size = 0x2000, scoped, tag = 'input window, operand 0, single buffered']
    #allocation4 [shape = 's32[1]{0}', space=sflag, size = 0x4, scoped, tag = 'scoped memory for flux_joint_attention.6']
    #allocation5 [shape = 'u8[65536]{0}', space=vmem, size = 0x10000, scoped, tag = 'input window, operand 1, single buffered']
    #allocation6 [shape = 's32[1]{0}', space=sflag, size = 0x4, scoped, tag = 'scoped memory for flux_joint_attention.6']
    %8 = vsyncpa [#allocation4], 0
    %9 = vsyncpa [#allocation6], 0
    // Predicated region
    $region2: #{flux_joint_attention.6} parent=1 // pred_check
      _
    $region3: #{flux_joint_attention.6} parent=1 // pred_check_branch
      %11 = sbr.rel (0) target = $region5
    $region4: #{flux_joint_attention.6} parent=1 // pred_region
      %13 = vsyncadd [#allocation4], 0
      %s14 = sshll.u32 %s0, 4
      %s15 = int_to_ptr.hbm [resolvable:$true] %s14
      %s16 = sshll.u32 [#allocation3], 4
      %s17 = int_to_ptr.vmem [resolvable:$true] %s16
      %22 = dma.hbm_to_vmem [thread:$0]  %s15, 256, %s17, [#allocation4], 128, 128, 8
    $region5: #{flux_joint_attention.6} parent=1 // pred_fallthru
      _
    // Predicated region
    $region6: #{flux_joint_attention.6} parent=1 // pred_check
      _
    $region7: #{flux_joint_attention.6} parent=1 // pred_check_branch
      %24 = sbr.rel (0) target = $region9
    $region8: #{flux_joint_attention.6} parent=1 // pred_region
      %26 = vsyncadd [#allocation6], 0
      %s27 = sshll.u32 %s1, 4
      %s28 = int_to_ptr.hbm [resolvable:$true] %s27
      %s29 = sshll.u32 [#allocation5], 4
      %s30 = int_to_ptr.vmem [resolvable:$true] %s29
      %35 = dma.hbm_to_vmem [thread:$0]  %s28, 2048, %s30, [#allocation6], 256, 256, 16
    $region9: #{flux_joint_attention.6} parent=1 // pred_fallthru
      _
    // Predicated region
    $region10: #{flux_joint_attention.6} parent=1 // pred_check
      _
    $region11: #{flux_joint_attention.6} parent=1 // pred_check_branch
      %37 = sbr.rel (0) target = $region13
    $region12: #{flux_joint_attention.6} parent=1 // pred_region
      _
    $region13: #{flux_joint_attention.6} parent=1 // pred_fallthru
      _
    // Predicated region
    $region14: #{flux_joint_attention.6} parent=1 // pred_check
      _
    $region15: #{flux_joint_attention.6} parent=1 // pred_check_branch
      %39 = sbr.rel (0) target = $region17
    $region16: #{flux_joint_attention.6} parent=1 // pred_region
      %41 = dma.done [#allocation4], 256
    $region17: #{flux_joint_attention.6} parent=1 // pred_fallthru
      _
    // Predicated region
    $region18: #{flux_joint_attention.6} parent=1 // pred_check
      _
    $region19: #{flux_joint_attention.6} parent=1 // pred_check_branch
      %43 = sbr.rel (0) target = $region21
    $region20: #{flux_joint_attention.6} parent=1 // pred_region
      %45 = dma.done [#allocation6], 2048
    $region21: #{flux_joint_attention.6} parent=1 // pred_fallthru
      _
    %p46 = scmp.eq.s32.totalorder 0, 0
    // Predicated region
    $region22: #{flux_joint_attention.6} parent=1 // pred_check
      %p47 = pneg %p46
    $region23: #{flux_joint_attention.6} parent=1 // pred_check_branch
      %49 = sbr.rel (%p47) target = $region25
    $region24: #{flux_joint_attention.6} parent=1 // pred_region
      %50 = vst [vmem:[#allocation2] sm:$0xff] 0.0
      %vm51 = vcmask 523264
      %52 = vst.msk [vmem:[#allocation2 + $0x8] sm:$0xff] %vm51, 0.0
      %53 = vst [vmem:[#allocation2 + $0x10] sm:$0xff] 0.0
      %54 = vst.msk [vmem:[#allocation2 + $0x18] sm:$0xff] %vm51, 0.0
    $region25: #{flux_joint_attention.6} parent=1 // pred_fallthru
      _
    %v55 = vld [vmem:[#allocation2] sm:$0xff]
    %v56 = vld [vmem:[#allocation2 + $0x8] sm:$0xff]
    %v57 = vld [vmem:[#allocation2 + $0x10] sm:$0xff]
    %v58 = vld [vmem:[#allocation2 + $0x18] sm:$0xff]
    %v59 = vld [vmem:[#allocation3] sm:$0xff]
    %v60 = vld [vmem:[#allocation3 + $0x8] sm:$0xff]
    %v61 = vld [vmem:[#allocation5] sm:$0xff]
    %v62 = vld [vmem:[#allocation5 + $0x8] sm:$0xff]
    %v63 = vld [vmem:[#allocation5 + $0x10] sm:$0xff]
    %v64 = vld [vmem:[#allocation5 + $0x18] sm:$0xff]
    %v65 = vld [vmem:[#allocation5 + $0x20] sm:$0xff]
    %v66 = vld [vmem:[#allocation5 + $0x28] sm:$0xff]
    %v67 = vld [vmem:[#allocation5 + $0x30] sm:$0xff]
    %v68 = vld [vmem:[#allocation5 + $0x38] sm:$0xff]
    %v69 = vld [vmem:[#allocation5 + $0x40] sm:$0xff]
    %v70 = vld [vmem:[#allocation5 + $0x48] sm:$0xff]
    %v71 = vld [vmem:[#allocation5 + $0x50] sm:$0xff]
    %v72 = vld [vmem:[#allocation5 + $0x58] sm:$0xff]
    %v73 = vld [vmem:[#allocation5 + $0x60] sm:$0xff]
    %v74 = vld [vmem:[#allocation5 + $0x68] sm:$0xff]
    %v75 = vld [vmem:[#allocation5 + $0x70] sm:$0xff]
    %v76 = vld [vmem:[#allocation5 + $0x78] sm:$0xff]
    %vm77 = vcmask 523264
    %v79 = vsel %vm77, %v59, 0
    %v82 = vsel %vm77, %v60, 0
    %84 = vmatpush.msra.mxu0 0.0
    %85 = vmatpush.msra.mxu0 0.0
    %86 = vmatpush.msra.mxu0 0.0
    %87 = vmatpush.msra.mxu0 0.0
    %88 = vmatpush.msra.mxu0 0.0
    %89 = vmatpush.msra.mxu0 0.0
    %90 = vmatpush.msra.mxu0 0.0
    %91 = vmatpush.msra.mxu0 0.0
    %92 = vmatpush.msra.mxu0 %v75
    %93 = vmatpush.msra.mxu0 %v73
    %94 = vmatpush.msra.mxu0 %v71
    %95 = vmatpush.msra.mxu0 %v69
    %96 = vmatpush.msra.mxu0 %v67
    %97 = vmatpush.msra.mxu0 %v65
    %98 = vmatpush.msra.mxu0 %v63
    %99 = vmatpush.msra.mxu0 %v61
    %100 = vmatmul.f32.gmra.mxu0 %v79
    %v101 = vpop.f32.mrf.mxu0
    %v102 = vadd.f32 0.0, %v101
    %103 = vmatmul.f32.gmra.mxu0 %v82
    %v104 = vpop.f32.mrf.mxu0
    %v105 = vadd.f32 0.0, %v104
    %106 = vdwg.mxu0
    %107 = vmatpush.msra.mxu0 0.0
    %108 = vmatpush.msra.mxu0 0.0
    %109 = vmatpush.msra.mxu0 0.0
    %110 = vmatpush.msra.mxu0 0.0
    %111 = vmatpush.msra.mxu0 0.0
    %112 = vmatpush.msra.mxu0 0.0
    %113 = vmatpush.msra.mxu0 0.0
    %114 = vmatpush.msra.mxu0 0.0
    %115 = vmatpush.msra.mxu0 %v76
    %116 = vmatpush.msra.mxu0 %v74
    %117 = vmatpush.msra.mxu0 %v72
    %118 = vmatpush.msra.mxu0 %v70
    %119 = vmatpush.msra.mxu0 %v68
    %120 = vmatpush.msra.mxu0 %v66
    %121 = vmatpush.msra.mxu0 %v64
    %122 = vmatpush.msra.mxu0 %v62
    %123 = vmatmul.f32.gmra.mxu0 %v79
    %v124 = vpop.f32.mrf.mxu0
    %v125 = vadd.f32 0.0, %v124
    %126 = vmatmul.f32.gmra.mxu0 %v82
    %v127 = vpop.f32.mrf.mxu0
    %v128 = vadd.f32 0.0, %v127
    %129 = vdwg.mxu0
    %v130 = vadd.f32 %v55, %v102
    %v131 = vadd.f32 %v56, %v125
    %v132 = vadd.f32 %v57, %v105
    %v133 = vadd.f32 %v58, %v128
    %134 = vst [vmem:[#allocation2] sm:$0xff] %v130
    %135 = vst.msk [vmem:[#allocation2 + $0x8] sm:$0xff] %vm77, %v131
    %136 = vst [vmem:[#allocation2 + $0x10] sm:$0xff] %v132
    %137 = vst.msk [vmem:[#allocation2 + $0x18] sm:$0xff] %vm77, %v133
    // Predicated region
    $region26: #{flux_joint_attention.6} parent=1 // pred_check
      %p138 = pneg %p46
    $region27: #{flux_joint_attention.6} parent=1 // pred_check_branch
      %140 = sbr.rel (%p138) target = $region29
    $region28: #{flux_joint_attention.6} parent=1 // pred_region
      %v141 = vld [vmem:[#allocation2] sm:$0xff]
      %v142 = vld [vmem:[#allocation2 + $0x8] sm:$0xff]
      %v143 = vld [vmem:[#allocation2 + $0x10] sm:$0xff]
      %v144 = vld [vmem:[#allocation2 + $0x18] sm:$0xff]
      %v145 = vld [vmem:[%s2] sm:$0x3]
      %v147 = vperm.slane %v145, 0
      %v148 = vperm.slane %v145, 1
      %v151 = vadd.f32 %v141, %v147
      %v152 = vadd.f32 %v142, %v148
      %v153 = vadd.f32 %v143, %v147
      %v154 = vadd.f32 %v144, %v148
      %155 = vst [vmem:[%s3] sm:$0xff] %v151
      %156 = vst.msk [vmem:[%s3 + $0x8] sm:$0xff] %vm77, %v152
      %157 = vst [vmem:[%s3 + $0x10] sm:$0xff] %v153
      %158 = vst.msk [vmem:[%s3 + $0x18] sm:$0xff] %vm77, %v154
    $region29: #{flux_joint_attention.6} parent=1 // pred_fallthru
      _
    // Predicated region
    $region30: #{flux_joint_attention.6} parent=1 // pred_check
      _
    $region31: #{flux_joint_attention.6} parent=1 // pred_check_branch
      %160 = sbr.rel (0) target = $region33
    $region32: #{flux_joint_attention.6} parent=1 // pred_region
      _
    $region33: #{flux_joint_attention.6} parent=1 // pred_fallthru
      _
    // Predicated region
    $region34: #{flux_joint_attention.6} parent=1 // pred_check
      _
    $region35: #{flux_joint_attention.6} parent=1 // pred_check_branch
      %162 = sbr.rel (0) target = $region37
    $region36: #{flux_joint_attention.6} parent=1 // pred_region
      _
    $region37: #{flux_joint_attention.6} parent=1 // pred_fallthru
      _
    %163 = vsyncpa [#allocation4], 1
    %164 = vsyncpa [#allocation6], 1

// kernel: flux_joint_attention.5
$region0: #{flux_joint_attention.5}
  #allocation0 [shape = 'u32[]', space=smem, size = 0x4, offset = 0x4, fixed_abs, tag = 'smem constant byte address 0x4 - core index']
  #allocation1 [shape = 'u32[72,128]{1,0:T(1,128)}', space=vmem, size = 0x9000, scoped, tag = 'internal scratch']
  #allocation2 [shape = 'f32[32,192]{1,0:T(8,128)}', space=vmem, size = 0x8000, scoped, tag = 'scratch operand']
  %s0 = inlined_call_operand.vmem [shape: f32[32,64], index: 0, kind: input, shape index: {}]
  %s1 = inlined_call_operand.vmem [shape: f32[64,192], index: 1, kind: input, shape index: {}]
  %s2 = inlined_call_operand.vmem [shape: f32[1,192], index: 2, kind: input, shape index: {}]
  %s3 = inlined_call_operand.vmem [shape: f32[32,192], index: 3, kind: output, shape index: {}]
  %s4 = sld [smem:[#allocation0]]
  $region30: #{flux_joint_attention.5} parent=0
    _
  %s6 = ssub.s32 1, %s4
  %s7 = scalar_select 0, %s6, %s4
  // Predicated region
  $region2: #{flux_joint_attention.5} parent=0 // pred_check
    _
  $region3: #{flux_joint_attention.5} parent=0 // pred_check_branch
    %9 = sbr.rel (0) target = $region5
  $region4: #{flux_joint_attention.5} parent=0 // pred_region
    _
  $region5: #{flux_joint_attention.5} parent=0 // pred_fallthru
    _
  // Predicated region
  $region6: #{flux_joint_attention.5} parent=0 // pred_check
    _
  $region7: #{flux_joint_attention.5} parent=0 // pred_check_branch
    %11 = sbr.rel (0) target = $region9
  $region8: #{flux_joint_attention.5} parent=0 // pred_region
    _
  $region9: #{flux_joint_attention.5} parent=0 // pred_fallthru
    _
  // Predicated region
  $region10: #{flux_joint_attention.5} parent=0 // pred_check
    _
  $region11: #{flux_joint_attention.5} parent=0 // pred_check_branch
    %13 = sbr.rel (0) target = $region13
  $region12: #{flux_joint_attention.5} parent=0 // pred_region
    _
  $region13: #{flux_joint_attention.5} parent=0 // pred_fallthru
    _
  %p14 = scmp.eq.s32.totalorder 0, 0
  // Predicated region
  $region14: #{flux_joint_attention.5} parent=0 // pred_check
    %p15 = pneg %p14
  $region15: #{flux_joint_attention.5} parent=0 // pred_check_branch
    %17 = sbr.rel (%p15) target = $region17
  $region16: #{flux_joint_attention.5} parent=0 // pred_region
    %18 = vst [vmem:[#allocation2] sm:$0xff] 0.0
    %vm19 = vcmask 523264
    %20 = vst.msk [vmem:[#allocation2 + $0x8] sm:$0xff] %vm19, 0.0
    %21 = vst [vmem:[#allocation2 + $0x10] sm:$0xff] 0.0
    %22 = vst.msk [vmem:[#allocation2 + $0x18] sm:$0xff] %vm19, 0.0
    %23 = vst [vmem:[#allocation2 + $0x20] sm:$0xff] 0.0
    %24 = vst.msk [vmem:[#allocation2 + $0x28] sm:$0xff] %vm19, 0.0
    %25 = vst [vmem:[#allocation2 + $0x30] sm:$0xff] 0.0
    %26 = vst.msk [vmem:[#allocation2 + $0x38] sm:$0xff] %vm19, 0.0
  $region17: #{flux_joint_attention.5} parent=0 // pred_fallthru
    _
  %v27 = vld [vmem:[#allocation2] sm:$0xff]
  %v28 = vld [vmem:[#allocation2 + $0x8] sm:$0xff]
  %v29 = vld [vmem:[#allocation2 + $0x10] sm:$0xff]
  %v30 = vld [vmem:[#allocation2 + $0x18] sm:$0xff]
  %v31 = vld [vmem:[#allocation2 + $0x20] sm:$0xff]
  %v32 = vld [vmem:[#allocation2 + $0x28] sm:$0xff]
  %v33 = vld [vmem:[#allocation2 + $0x30] sm:$0xff]
  %v34 = vld [vmem:[#allocation2 + $0x38] sm:$0xff]
  %v35 = vld [vmem:[%s0] sm:$0xff]
  %v36 = vld [vmem:[%s0 + $0x8] sm:$0xff]
  %v37 = vld [vmem:[%s0 + $0x10] sm:$0xff]
  %v38 = vld [vmem:[%s0 + $0x18] sm:$0xff]
  %v39 = vld [vmem:[%s1] sm:$0xff]
  %v40 = vld [vmem:[%s1 + $0x8] sm:$0xff]
  %v41 = vld [vmem:[%s1 + $0x10] sm:$0xff]
  %v42 = vld [vmem:[%s1 + $0x18] sm:$0xff]
  %v43 = vld [vmem:[%s1 + $0x20] sm:$0xff]
  %v44 = vld [vmem:[%s1 + $0x28] sm:$0xff]
  %v45 = vld [vmem:[%s1 + $0x30] sm:$0xff]
  %v46 = vld [vmem:[%s1 + $0x38] sm:$0xff]
  %v47 = vld [vmem:[%s1 + $0x40] sm:$0xff]
  %v48 = vld [vmem:[%s1 + $0x48] sm:$0xff]
  %v49 = vld [vmem:[%s1 + $0x50] sm:$0xff]
  %v50 = vld [vmem:[%s1 + $0x58] sm:$0xff]
  %v51 = vld [vmem:[%s1 + $0x60] sm:$0xff]
  %v52 = vld [vmem:[%s1 + $0x68] sm:$0xff]
  %v53 = vld [vmem:[%s1 + $0x70] sm:$0xff]
  %v54 = vld [vmem:[%s1 + $0x78] sm:$0xff]
  %vm55 = vcmask 523264
  %v57 = vsel %vm55, %v35, 0
  %v60 = vsel %vm55, %v36, 0
  %v63 = vsel %vm55, %v37, 0
  %v66 = vsel %vm55, %v38, 0
  %68 = vmatpush.msra.mxu0 0.0
  %69 = vmatpush.msra.mxu0 0.0
  %70 = vmatpush.msra.mxu0 0.0
  %71 = vmatpush.msra.mxu0 0.0
  %72 = vmatpush.msra.mxu0 0.0
  %73 = vmatpush.msra.mxu0 0.0
  %74 = vmatpush.msra.mxu0 0.0
  %75 = vmatpush.msra.mxu0 0.0
  %76 = vmatpush.msra.mxu0 %v53
  %77 = vmatpush.msra.mxu0 %v51
  %78 = vmatpush.msra.mxu0 %v49
  %79 = vmatpush.msra.mxu0 %v47
  %80 = vmatpush.msra.mxu0 %v45
  %81 = vmatpush.msra.mxu0 %v43
  %82 = vmatpush.msra.mxu0 %v41
  %83 = vmatpush.msra.mxu0 %v39
  %84 = vmatmul.f32.gmra.mxu0 %v57
  %v85 = vpop.f32.mrf.mxu0
  %v86 = vadd.f32 0.0, %v85
  %87 = vmatmul.f32.gmra.mxu0 %v60
  %v88 = vpop.f32.mrf.mxu0
  %v89 = vadd.f32 0.0, %v88
  %90 = vmatmul.f32.gmra.mxu0 %v63
  %v91 = vpop.f32.mrf.mxu0
  %v92 = vadd.f32 0.0, %v91
  %93 = vmatmul.f32.gmra.mxu0 %v66
  %v94 = vpop.f32.mrf.mxu0
  %v95 = vadd.f32 0.0, %v94
  %96 = vdwg.mxu0
  %97 = vmatpush.msra.mxu0 0.0
  %98 = vmatpush.msra.mxu0 0.0
  %99 = vmatpush.msra.mxu0 0.0
  %100 = vmatpush.msra.mxu0 0.0
  %101 = vmatpush.msra.mxu0 0.0
  %102 = vmatpush.msra.mxu0 0.0
  %103 = vmatpush.msra.mxu0 0.0
  %104 = vmatpush.msra.mxu0 0.0
  %105 = vmatpush.msra.mxu0 %v54
  %106 = vmatpush.msra.mxu0 %v52
  %107 = vmatpush.msra.mxu0 %v50
  %108 = vmatpush.msra.mxu0 %v48
  %109 = vmatpush.msra.mxu0 %v46
  %110 = vmatpush.msra.mxu0 %v44
  %111 = vmatpush.msra.mxu0 %v42
  %112 = vmatpush.msra.mxu0 %v40
  %113 = vmatmul.f32.gmra.mxu0 %v57
  %v114 = vpop.f32.mrf.mxu0
  %v115 = vadd.f32 0.0, %v114
  %116 = vmatmul.f32.gmra.mxu0 %v60
  %v117 = vpop.f32.mrf.mxu0
  %v118 = vadd.f32 0.0, %v117
  %119 = vmatmul.f32.gmra.mxu0 %v63
  %v120 = vpop.f32.mrf.mxu0
  %v121 = vadd.f32 0.0, %v120
  %122 = vmatmul.f32.gmra.mxu0 %v66
  %v123 = vpop.f32.mrf.mxu0
  %v124 = vadd.f32 0.0, %v123
  %125 = vdwg.mxu0
  %v126 = vadd.f32 %v27, %v86
  %v127 = vadd.f32 %v28, %v115
  %v128 = vadd.f32 %v29, %v89
  %v129 = vadd.f32 %v30, %v118
  %v130 = vadd.f32 %v31, %v92
  %v131 = vadd.f32 %v32, %v121
  %v132 = vadd.f32 %v33, %v95
  %v133 = vadd.f32 %v34, %v124
  %134 = vst [vmem:[#allocation2] sm:$0xff] %v126
  %135 = vst.msk [vmem:[#allocation2 + $0x8] sm:$0xff] %vm55, %v127
  %136 = vst [vmem:[#allocation2 + $0x10] sm:$0xff] %v128
  %137 = vst.msk [vmem:[#allocation2 + $0x18] sm:$0xff] %vm55, %v129
  %138 = vst [vmem:[#allocation2 + $0x20] sm:$0xff] %v130
  %139 = vst.msk [vmem:[#allocation2 + $0x28] sm:$0xff] %vm55, %v131
  %140 = vst [vmem:[#allocation2 + $0x30] sm:$0xff] %v132
  %141 = vst.msk [vmem:[#allocation2 + $0x38] sm:$0xff] %vm55, %v133
  // Predicated region
  $region18: #{flux_joint_attention.5} parent=0 // pred_check
    %p142 = pneg %p14
  $region19: #{flux_joint_attention.5} parent=0 // pred_check_branch
    %144 = sbr.rel (%p142) target = $region21
  $region20: #{flux_joint_attention.5} parent=0 // pred_region
    %v145 = vld [vmem:[#allocation2] sm:$0xff]
    %v146 = vld [vmem:[#allocation2 + $0x8] sm:$0xff]
    %v147 = vld [vmem:[#allocation2 + $0x10] sm:$0xff]
    %v148 = vld [vmem:[#allocation2 + $0x18] sm:$0xff]
    %v149 = vld [vmem:[#allocation2 + $0x20] sm:$0xff]
    %v150 = vld [vmem:[#allocation2 + $0x28] sm:$0xff]
    %v151 = vld [vmem:[#allocation2 + $0x30] sm:$0xff]
    %v152 = vld [vmem:[#allocation2 + $0x38] sm:$0xff]
    %v153 = vld [vmem:[%s2] sm:$0x3]
    %v155 = vperm.slane %v153, 0
    %v156 = vperm.slane %v153, 1
    %v159 = vadd.f32 %v145, %v155
    %v160 = vadd.f32 %v146, %v156
    %v161 = vadd.f32 %v147, %v155
    %v162 = vadd.f32 %v148, %v156
    %v163 = vadd.f32 %v149, %v155
    %v164 = vadd.f32 %v150, %v156
    %v165 = vadd.f32 %v151, %v155
    %v166 = vadd.f32 %v152, %v156
    %167 = vst [vmem:[%s3] sm:$0xff] %v159
    %168 = vst.msk [vmem:[%s3 + $0x8] sm:$0xff] %vm55, %v160
    %169 = vst [vmem:[%s3 + $0x10] sm:$0xff] %v161
    %170 = vst.msk [vmem:[%s3 + $0x18] sm:$0xff] %vm55, %v162
    %171 = vst [vmem:[%s3 + $0x20] sm:$0xff] %v163
    %172 = vst.msk [vmem:[%s3 + $0x28] sm:$0xff] %vm55, %v164
    %173 = vst [vmem:[%s3 + $0x30] sm:$0xff] %v165
    %174 = vst.msk [vmem:[%s3 + $0x38] sm:$0xff] %vm55, %v166
  $region21: #{flux_joint_attention.5} parent=0 // pred_fallthru
    _
  // Predicated region
  $region22: #{flux_joint_attention.5} parent=0 // pred_check
    _
  $region23: #{flux_joint_attention.5} parent=0 // pred_check_branch
    %176 = sbr.rel (0) target = $region25
  $region24: #{flux_joint_attention.5} parent=0 // pred_region
    _
  $region25: #{flux_joint_attention.5} parent=0 // pred_fallthru
    _
  // Predicated region
  $region26: #{flux_joint_attention.5} parent=0 // pred_check
    _
  $region27: #{flux_joint_attention.5} parent=0 // pred_check_branch
    %178 = sbr.rel (0) target = $region29
  $region28: #{flux_joint_attention.5} parent=0 // pred_region
    _
  $region29: #{flux_joint_attention.5} parent=0 // pred_fallthru
    _

// kernel: flux_joint_attention.8
$region0: #{flux_joint_attention.8}
  #allocation0 [shape = 'u32[]', space=smem, size = 0x4, offset = 0x4, fixed_abs, tag = 'smem constant byte address 0x4 - core index']
  #allocation1 [shape = 'u32[72,128]{1,0:T(1,128)}', space=vmem, size = 0x9000, scoped, tag = 'internal scratch']
  #allocation2 [shape = 'f32[32,64]{1,0:T(8,128)}', space=vmem, size = 0x4000, scoped, tag = 'scratch operand']
  %s0 = inlined_call_operand.vmem [shape: f32[32,64], index: 0, kind: input, shape index: {}]
  %s1 = inlined_call_operand.vmem [shape: f32[64,64], index: 1, kind: input, shape index: {}]
  %s2 = inlined_call_operand.vmem [shape: f32[1,64], index: 2, kind: input, shape index: {}]
  %s3 = inlined_call_operand.hbm [shape: f32[32,64], index: 3, kind: output, shape index: {}]
  %s4 = sld [smem:[#allocation0]]
  $region30: #{flux_joint_attention.8} parent=0
    _
  %s6 = ssub.s32 1, %s4
  %s7 = scalar_select 0, %s6, %s4
  $region1: #{flux_joint_attention.8} parent=0
    #allocation3 [shape = 'u8[16384]{0}', space=vmem, size = 0x4000, scoped, tag = 'output window, operand 0, single buffered']
    #allocation4 [shape = 's32[1]{0}', space=sflag, size = 0x4, scoped, tag = 'scoped memory for flux_joint_attention.8']
    %8 = vsyncpa [#allocation4], 0
    // Predicated region
    $region2: #{flux_joint_attention.8} parent=1 // pred_check
      _
    $region3: #{flux_joint_attention.8} parent=1 // pred_check_branch
      %10 = sbr.rel (0) target = $region5
    $region4: #{flux_joint_attention.8} parent=1 // pred_region
      _
    $region5: #{flux_joint_attention.8} parent=1 // pred_fallthru
      _
    // Predicated region
    $region6: #{flux_joint_attention.8} parent=1 // pred_check
      _
    $region7: #{flux_joint_attention.8} parent=1 // pred_check_branch
      %12 = sbr.rel (0) target = $region9
    $region8: #{flux_joint_attention.8} parent=1 // pred_region
      _
    $region9: #{flux_joint_attention.8} parent=1 // pred_fallthru
      _
    // Predicated region
    $region10: #{flux_joint_attention.8} parent=1 // pred_check
      _
    $region11: #{flux_joint_attention.8} parent=1 // pred_check_branch
      %14 = sbr.rel (0) target = $region13
    $region12: #{flux_joint_attention.8} parent=1 // pred_region
      _
    $region13: #{flux_joint_attention.8} parent=1 // pred_fallthru
      _
    %p15 = scmp.eq.s32.totalorder 0, 0
    // Predicated region
    $region14: #{flux_joint_attention.8} parent=1 // pred_check
      %p16 = pneg %p15
    $region15: #{flux_joint_attention.8} parent=1 // pred_check_branch
      %18 = sbr.rel (%p16) target = $region17
    $region16: #{flux_joint_attention.8} parent=1 // pred_region
      %vm19 = vcmask 523264
      %20 = vst.msk [vmem:[#allocation2] sm:$0xff] %vm19, 0.0
      %21 = vst.msk [vmem:[#allocation2 + $0x8] sm:$0xff] %vm19, 0.0
      %22 = vst.msk [vmem:[#allocation2 + $0x10] sm:$0xff] %vm19, 0.0
      %23 = vst.msk [vmem:[#allocation2 + $0x18] sm:$0xff] %vm19, 0.0
    $region17: #{flux_joint_attention.8} parent=1 // pred_fallthru
      _
    %v24 = vld [vmem:[#allocation2] sm:$0xff]
    %v25 = vld [vmem:[#allocation2 + $0x8] sm:$0xff]
    %v26 = vld [vmem:[#allocation2 + $0x10] sm:$0xff]
    %v27 = vld [vmem:[#allocation2 + $0x18] sm:$0xff]
    %v28 = vld [vmem:[%s0] sm:$0xff]
    %v29 = vld [vmem:[%s0 + $0x8] sm:$0xff]
    %v30 = vld [vmem:[%s0 + $0x10] sm:$0xff]
    %v31 = vld [vmem:[%s0 + $0x18] sm:$0xff]
    %v32 = vld [vmem:[%s1] sm:$0xff]
    %v33 = vld [vmem:[%s1 + $0x8] sm:$0xff]
    %v34 = vld [vmem:[%s1 + $0x10] sm:$0xff]
    %v35 = vld [vmem:[%s1 + $0x18] sm:$0xff]
    %v36 = vld [vmem:[%s1 + $0x20] sm:$0xff]
    %v37 = vld [vmem:[%s1 + $0x28] sm:$0xff]
    %v38 = vld [vmem:[%s1 + $0x30] sm:$0xff]
    %v39 = vld [vmem:[%s1 + $0x38] sm:$0xff]
    %vm40 = vcmask 523264
    %v42 = vsel %vm40, %v28, 0
    %v45 = vsel %vm40, %v29, 0
    %v48 = vsel %vm40, %v30, 0
    %v51 = vsel %vm40, %v31, 0
    %53 = vmatpush.msra.mxu0 0.0
    %54 = vmatpush.msra.mxu0 0.0
    %55 = vmatpush.msra.mxu0 0.0
    %56 = vmatpush.msra.mxu0 0.0
    %57 = vmatpush.msra.mxu0 0.0
    %58 = vmatpush.msra.mxu0 0.0
    %59 = vmatpush.msra.mxu0 0.0
    %60 = vmatpush.msra.mxu0 0.0
    %61 = vmatpush.msra.mxu0 %v39
    %62 = vmatpush.msra.mxu0 %v38
    %63 = vmatpush.msra.mxu0 %v37
    %64 = vmatpush.msra.mxu0 %v36
    %65 = vmatpush.msra.mxu0 %v35
    %66 = vmatpush.msra.mxu0 %v34
    %67 = vmatpush.msra.mxu0 %v33
    %68 = vmatpush.msra.mxu0 %v32
    %69 = vmatmul.f32.gmra.mxu0 %v42
    %v70 = vpop.f32.mrf.mxu0
    %v71 = vadd.f32 0.0, %v70
    %72 = vmatmul.f32.gmra.mxu0 %v45
    %v73 = vpop.f32.mrf.mxu0
    %v74 = vadd.f32 0.0, %v73
    %75 = vmatmul.f32.gmra.mxu0 %v48
    %v76 = vpop.f32.mrf.mxu0
    %v77 = vadd.f32 0.0, %v76
    %78 = vmatmul.f32.gmra.mxu0 %v51
    %v79 = vpop.f32.mrf.mxu0
    %v80 = vadd.f32 0.0, %v79
    %81 = vdwg.mxu0
    %v82 = vadd.f32 %v24, %v71
    %v83 = vadd.f32 %v25, %v74
    %v84 = vadd.f32 %v26, %v77
    %v85 = vadd.f32 %v27, %v80
    %86 = vst.msk [vmem:[#allocation2] sm:$0xff] %vm40, %v82
    %87 = vst.msk [vmem:[#allocation2 + $0x8] sm:$0xff] %vm40, %v83
    %88 = vst.msk [vmem:[#allocation2 + $0x10] sm:$0xff] %vm40, %v84
    %89 = vst.msk [vmem:[#allocation2 + $0x18] sm:$0xff] %vm40, %v85
    // Predicated region
    $region18: #{flux_joint_attention.8} parent=1 // pred_check
      %p90 = pneg %p15
    $region19: #{flux_joint_attention.8} parent=1 // pred_check_branch
      %92 = sbr.rel (%p90) target = $region21
    $region20: #{flux_joint_attention.8} parent=1 // pred_region
      %v93 = vld [vmem:[#allocation2] sm:$0xff]
      %v94 = vld [vmem:[#allocation2 + $0x8] sm:$0xff]
      %v95 = vld [vmem:[#allocation2 + $0x10] sm:$0xff]
      %v96 = vld [vmem:[#allocation2 + $0x18] sm:$0xff]
      %v97 = vld [vmem:[%s2] sm:$0x1]
      %v99 = vperm.slane %v97, 0
      %v101 = vadd.f32 %v93, %v99
      %v102 = vadd.f32 %v94, %v99
      %v103 = vadd.f32 %v95, %v99
      %v104 = vadd.f32 %v96, %v99
      %105 = vst.msk [vmem:[#allocation3] sm:$0xff] %vm40, %v101
      %106 = vst.msk [vmem:[#allocation3 + $0x8] sm:$0xff] %vm40, %v102
      %107 = vst.msk [vmem:[#allocation3 + $0x10] sm:$0xff] %vm40, %v103
      %108 = vst.msk [vmem:[#allocation3 + $0x18] sm:$0xff] %vm40, %v104
    $region21: #{flux_joint_attention.8} parent=1 // pred_fallthru
      _
    // Predicated region
    $region22: #{flux_joint_attention.8} parent=1 // pred_check
      _
    $region23: #{flux_joint_attention.8} parent=1 // pred_check_branch
      %110 = sbr.rel (0) target = $region25
    $region24: #{flux_joint_attention.8} parent=1 // pred_region
      %112 = vsyncadd [#allocation4], 0
      %s113 = sshll.u32 [#allocation3], 4
      %s114 = int_to_ptr.vmem [resolvable:$true] %s113
      %s115 = sshll.u32 %s3, 4
      %s116 = int_to_ptr.hbm [resolvable:$true] %s115
      %121 = dma.vmem_to_hbm [thread:$0]  %s114, 512, %s116, [#allocation4], 128, 128, 8
    $region25: #{flux_joint_attention.8} parent=1 // pred_fallthru
      _
    // Predicated region
    $region26: #{flux_joint_attention.8} parent=1 // pred_check
      _
    $region27: #{flux_joint_attention.8} parent=1 // pred_check_branch
      %123 = sbr.rel (0) target = $region29
    $region28: #{flux_joint_attention.8} parent=1 // pred_region
      %125 = dma.done [#allocation4], 512
    $region29: #{flux_joint_attention.8} parent=1 // pred_fallthru
      _
    %126 = vsyncpa [#allocation4], 1

// kernel: flux_joint_attention.9
$region0: #{flux_joint_attention.9}
  #allocation0 [shape = 'u32[]', space=smem, size = 0x4, offset = 0x4, fixed_abs, tag = 'smem constant byte address 0x4 - core index']
  #allocation1 [shape = 'u32[72,128]{1,0:T(1,128)}', space=vmem, size = 0x9000, scoped, tag = 'internal scratch']
  #allocation2 [shape = 'f32[16,64]{1,0:T(8,128)}', space=vmem, size = 0x2000, scoped, tag = 'scratch operand']
  %s0 = inlined_call_operand.vmem [shape: f32[16,64], index: 0, kind: input, shape index: {}]
  %s1 = inlined_call_operand.vmem [shape: f32[64,64], index: 1, kind: input, shape index: {}]
  %s2 = inlined_call_operand.vmem [shape: f32[1,64], index: 2, kind: input, shape index: {}]
  %s3 = inlined_call_operand.hbm [shape: f32[16,64], index: 3, kind: output, shape index: {}]
  %s4 = sld [smem:[#allocation0]]
  $region30: #{flux_joint_attention.9} parent=0
    _
  %s6 = ssub.s32 1, %s4
  %s7 = scalar_select 0, %s6, %s4
  $region1: #{flux_joint_attention.9} parent=0
    #allocation3 [shape = 'u8[8192]{0}', space=vmem, size = 0x2000, scoped, tag = 'output window, operand 0, single buffered']
    #allocation4 [shape = 's32[1]{0}', space=sflag, size = 0x4, scoped, tag = 'scoped memory for flux_joint_attention.9']
    %8 = vsyncpa [#allocation4], 0
    // Predicated region
    $region2: #{flux_joint_attention.9} parent=1 // pred_check
      _
    $region3: #{flux_joint_attention.9} parent=1 // pred_check_branch
      %10 = sbr.rel (0) target = $region5
    $region4: #{flux_joint_attention.9} parent=1 // pred_region
      _
    $region5: #{flux_joint_attention.9} parent=1 // pred_fallthru
      _
    // Predicated region
    $region6: #{flux_joint_attention.9} parent=1 // pred_check
      _
    $region7: #{flux_joint_attention.9} parent=1 // pred_check_branch
      %12 = sbr.rel (0) target = $region9
    $region8: #{flux_joint_attention.9} parent=1 // pred_region
      _
    $region9: #{flux_joint_attention.9} parent=1 // pred_fallthru
      _
    // Predicated region
    $region10: #{flux_joint_attention.9} parent=1 // pred_check
      _
    $region11: #{flux_joint_attention.9} parent=1 // pred_check_branch
      %14 = sbr.rel (0) target = $region13
    $region12: #{flux_joint_attention.9} parent=1 // pred_region
      _
    $region13: #{flux_joint_attention.9} parent=1 // pred_fallthru
      _
    %p15 = scmp.eq.s32.totalorder 0, 0
    // Predicated region
    $region14: #{flux_joint_attention.9} parent=1 // pred_check
      %p16 = pneg %p15
    $region15: #{flux_joint_attention.9} parent=1 // pred_check_branch
      %18 = sbr.rel (%p16) target = $region17
    $region16: #{flux_joint_attention.9} parent=1 // pred_region
      %vm19 = vcmask 523264
      %20 = vst.msk [vmem:[#allocation2] sm:$0xff] %vm19, 0.0
      %21 = vst.msk [vmem:[#allocation2 + $0x8] sm:$0xff] %vm19, 0.0
    $region17: #{flux_joint_attention.9} parent=1 // pred_fallthru
      _
    %v22 = vld [vmem:[#allocation2] sm:$0xff]
    %v23 = vld [vmem:[#allocation2 + $0x8] sm:$0xff]
    %v24 = vld [vmem:[%s0] sm:$0xff]
    %v25 = vld [vmem:[%s0 + $0x8] sm:$0xff]
    %v26 = vld [vmem:[%s1] sm:$0xff]
    %v27 = vld [vmem:[%s1 + $0x8] sm:$0xff]
    %v28 = vld [vmem:[%s1 + $0x10] sm:$0xff]
    %v29 = vld [vmem:[%s1 + $0x18] sm:$0xff]
    %v30 = vld [vmem:[%s1 + $0x20] sm:$0xff]
    %v31 = vld [vmem:[%s1 + $0x28] sm:$0xff]
    %v32 = vld [vmem:[%s1 + $0x30] sm:$0xff]
    %v33 = vld [vmem:[%s1 + $0x38] sm:$0xff]
    %vm34 = vcmask 523264
    %v36 = vsel %vm34, %v24, 0
    %v39 = vsel %vm34, %v25, 0
    %41 = vmatpush.msra.mxu0 0.0
    %42 = vmatpush.msra.mxu0 0.0
    %43 = vmatpush.msra.mxu0 0.0
    %44 = vmatpush.msra.mxu0 0.0
    %45 = vmatpush.msra.mxu0 0.0
    %46 = vmatpush.msra.mxu0 0.0
    %47 = vmatpush.msra.mxu0 0.0
    %48 = vmatpush.msra.mxu0 0.0
    %49 = vmatpush.msra.mxu0 %v33
    %50 = vmatpush.msra.mxu0 %v32
    %51 = vmatpush.msra.mxu0 %v31
    %52 = vmatpush.msra.mxu0 %v30
    %53 = vmatpush.msra.mxu0 %v29
    %54 = vmatpush.msra.mxu0 %v28
    %55 = vmatpush.msra.mxu0 %v27
    %56 = vmatpush.msra.mxu0 %v26
    %57 = vmatmul.f32.gmra.mxu0 %v36
    %v58 = vpop.f32.mrf.mxu0
    %v59 = vadd.f32 0.0, %v58
    %60 = vmatmul.f32.gmra.mxu0 %v39
    %v61 = vpop.f32.mrf.mxu0
    %v62 = vadd.f32 0.0, %v61
    %63 = vdwg.mxu0
    %v64 = vadd.f32 %v22, %v59
    %v65 = vadd.f32 %v23, %v62
    %66 = vst.msk [vmem:[#allocation2] sm:$0xff] %vm34, %v64
    %67 = vst.msk [vmem:[#allocation2 + $0x8] sm:$0xff] %vm34, %v65
    // Predicated region
    $region18: #{flux_joint_attention.9} parent=1 // pred_check
      %p68 = pneg %p15
    $region19: #{flux_joint_attention.9} parent=1 // pred_check_branch
      %70 = sbr.rel (%p68) target = $region21
    $region20: #{flux_joint_attention.9} parent=1 // pred_region
      %v71 = vld [vmem:[#allocation2] sm:$0xff]
      %v72 = vld [vmem:[#allocation2 + $0x8] sm:$0xff]
      %v73 = vld [vmem:[%s2] sm:$0x1]
      %v75 = vperm.slane %v73, 0
      %v77 = vadd.f32 %v71, %v75
      %v78 = vadd.f32 %v72, %v75
      %79 = vst.msk [vmem:[#allocation3] sm:$0xff] %vm34, %v77
      %80 = vst.msk [vmem:[#allocation3 + $0x8] sm:$0xff] %vm34, %v78
    $region21: #{flux_joint_attention.9} parent=1 // pred_fallthru
      _
    // Predicated region
    $region22: #{flux_joint_attention.9} parent=1 // pred_check
      _
    $region23: #{flux_joint_attention.9} parent=1 // pred_check_branch
      %82 = sbr.rel (0) target = $region25
    $region24: #{flux_joint_attention.9} parent=1 // pred_region
      %84 = vsyncadd [#allocation4], 0
      %s85 = sshll.u32 [#allocation3], 4
      %s86 = int_to_ptr.vmem [resolvable:$true] %s85
      %s87 = sshll.u32 %s3, 4
      %s88 = int_to_ptr.hbm [resolvable:$true] %s87
      %93 = dma.vmem_to_hbm [thread:$0]  %s86, 256, %s88, [#allocation4], 128, 128, 8
    $region25: #{flux_joint_attention.9} parent=1 // pred_fallthru
      _
    // Predicated region
    $region26: #{flux_joint_attention.9} parent=1 // pred_check
      _
    $region27: #{flux_joint_attention.9} parent=1 // pred_check_branch
      %95 = sbr.rel (0) target = $region29
    $region28: #{flux_joint_attention.9} parent=1 // pred_region
      %97 = dma.done [#allocation4], 256
    $region29: #{flux_joint_attention.9} parent=1 // pred_fallthru
      _
    %98 = vsyncpa [#allocation4], 1

// kernel: flux_joint_attention.7
$region0: #{flux_joint_attention.7}
  #allocation0 [shape = 'u32[]', space=smem, size = 0x4, offset = 0x4, fixed_abs, tag = 'smem constant byte address 0x4 - core index']
  #allocation1 [shape = 'u32[72,128]{1,0:T(1,128)}', space=vmem, size = 0x9000, scoped, tag = 'internal scratch']
  #allocation2 [shape = 'f32[24,1]{1,0:T(8,128)}', space=vmem, size = 0x3000, scoped, tag = 'scratch operand']
  #allocation3 [shape = 'f32[24,1]{1,0:T(8,128)}', space=vmem, size = 0x3000, scoped, tag = 'scratch operand']
  #allocation4 [shape = 'f32[24,16]{1,0:T(8,128)}', space=vmem, size = 0x3000, scoped, tag = 'scratch operand']
  #allocation5 [shape = 'f32[24,16]{1,0:T(8,128)}', space=vmem, size = 0x3000, scoped, tag = 'scratch operand']
  %s0 = inlined_call_operand.vmem [shape: f32[2,4,24,16], index: 0, kind: input, shape index: {}]
  %s1 = inlined_call_operand.vmem [shape: f32[2,4,24,16], index: 1, kind: input, shape index: {}]
  %s2 = inlined_call_operand.vmem [shape: f32[2,4,24,16], index: 2, kind: input, shape index: {}]
  %s3 = inlined_call_operand.vmem [shape: f32[24,16], index: 3, kind: input, shape index: {}]
  %s4 = inlined_call_operand.vmem [shape: f32[24,16], index: 4, kind: input, shape index: {}]
  %s5 = inlined_call_operand.vmem [shape: f32[24,16], index: 5, kind: input, shape index: {}]
  %s6 = inlined_call_operand.vmem [shape: f32[24,16], index: 6, kind: input, shape index: {}]
  %s7 = inlined_call_operand.vmem [shape: f32[2,4,24,16], index: 7, kind: output, shape index: {}]
  %s8 = sld [smem:[#allocation0]]
  $region69: #{flux_joint_attention.7} parent=0
    _
  %s10 = ssub.s32 1, %s8
  %s11 = scalar_select 0, %s10, %s8
  loop: start=0, step=1, limit=10
  $region2: #{flux_joint_attention.7} parent=0 // loop_pre_header
    _
  $region3: #{flux_joint_attention.7} parent=0 // loop_header
    %s13 = sphi 0, %s17
    %p14 = scmp.ge.s32.totalorder %s13, 10
    %s20 = sphi 0, %s46
    %s21 = sphi 0, %s42
    %s22 = sphi 0, %s38
    %s23 = sphi 0, %s34
    %s24 = sphi 0, %s20
    %s25 = sphi 0, %s21
    %s26 = sphi 0, %s22
    %s27 = sphi 0, %s23
    %s28 = sphi 0, %s24
    %s29 = sphi 0, %s25
    %s30 = sphi 0, %s26
    %s31 = sphi 0, %s27
    %s53 = sphi 0, %s55
    %s56 = sphi 0, %s53
    %s57 = sphi 0, %s56
    %s73 = sphi 0, %s57
    %s83 = sphi 0, %s85
    %s86 = sphi 0, %s83
    %s87 = sphi 0, %s86
    %s103 = sphi 0, %s87
    %s113 = sphi 0, %s115
    %s116 = sphi 0, %s113
    %s117 = sphi 0, %s116
    %s133 = sphi 0, %s117
    %s139 = sphi 0, %s141
    %s142 = sphi 0, %s139
    %s143 = sphi 0, %s142
    %s159 = sphi 0, %s143
    %s165 = sphi 0, %s167
    %s168 = sphi 0, %s165
    %s169 = sphi 0, %s168
    %s185 = sphi 0, %s169
    %s191 = sphi 0, %s193
    %s194 = sphi 0, %s191
    %s195 = sphi 0, %s194
    %s211 = sphi 0, %s195
    %s217 = sphi 0, %s219
    %s220 = sphi 0, %s217
    %s221 = sphi 0, %s220
    %s237 = sphi 0, %s221
    %s247 = sphi 0, %s249
    %s250 = sphi 0, %s247
    %s251 = sphi 0, %s250
    %s267 = sphi 0, %s251
  $region4: #{flux_joint_attention.7} parent=0 // loop_header_branch
    %16 = sbr.rel (%p14) target = $region8
  $region5: #{flux_joint_attention.7} parent=0 // loop_body
    %s18 = ssub.s32 %s13, 1
    %s19 = ssub.s32 %s13, 2
    %s32 = sadd.s32 1, %s23
    %p33 = scmp.ge.s32.totalorder %s32, 1
    %s34 = scalar_select %p33, 0, %s32
    %s35 = sadd.s32 1, %s22
    %s36 = scalar_select %p33, %s35, %s22
    %p37 = scmp.ge.s32.totalorder %s36, 1
    %s38 = scalar_select %p37, 0, %s36
    %s39 = sadd.s32 1, %s21
    %s40 = scalar_select %p37, %s39, %s21
    %p41 = scmp.ge.s32.totalorder %s40, 4
    %s42 = scalar_select %p41, 0, %s40
    %s43 = sadd.s32 1, %s20
    %s44 = scalar_select %p41, %s43, %s20
    %p45 = scmp.ge.s32.totalorder %s44, 2
    %s46 = scalar_select %p45, 0, %s44
    %s47 = ssub.s32 %s20, %s46
    %s48 = ssub.s32 %s21, %s42
    %s49 = sor.u32 %s47, %s48
    %s50 = ssub.s32 %s22, %s38
    %s51 = sor.u32 %s49, %s50
    %p52 = scmp.eq.s32.totalorder %s51, 0
    %s54 = sadd.s32 %s53, 1
    %s55 = scalar_select %p52, %s53, %s54
    %p58 = pneg %p52
    %p59 = scmp.eq.s32.totalorder %s13, 7
    %p60 = por %p58, %p59
    %p61 = scmp.ne.s32.totalorder %s53, %s56
    %p62 = scmp.eq.s32.totalorder %s13, 0
    %p63 = por %p61, %p62
    %p64 = scmp.ne.s32.totalorder %s53, %s56
    %p65 = scmp.eq.s32.totalorder %s18, 7
    %p66 = por %p64, %p65
    %p67 = scmp.ne.s32.totalorder %s56, %s57
    %p68 = scmp.eq.s32.totalorder %s18, 0
    %p69 = por %p67, %p68
    %p70 = scmp.ne.s32.totalorder %s56, %s57
    %p71 = scmp.eq.s32.totalorder %s19, 7
    %p72 = por %p70, %p71
    %p74 = scmp.ne.s32.totalorder %s57, %s73
    %p75 = scmp.eq.s32.totalorder %s19, 0
    %p76 = por %p74, %p75
    %s77 = ssub.s32 %s20, %s46
    %s78 = ssub.s32 %s21, %s42
    %s79 = sor.u32 %s77, %s78
    %s80 = ssub.s32 %s23, %s34
    %s81 = sor.u32 %s79, %s80
    %p82 = scmp.eq.s32.totalorder %s81, 0
    %s84 = sadd.s32 %s83, 1
    %s85 = scalar_select %p82, %s83, %s84
    %p88 = pneg %p82
    %p89 = scmp.eq.s32.totalorder %s13, 7
    %p90 = por %p88, %p89
    %p91 = scmp.ne.s32.totalorder %s83, %s86
    %p92 = scmp.eq.s32.totalorder %s13, 0
    %p93 = por %p91, %p92
    %p94 = scmp.ne.s32.totalorder %s83, %s86
    %p95 = scmp.eq.s32.totalorder %s18, 7
    %p96 = por %p94, %p95
    %p97 = scmp.ne.s32.totalorder %s86, %s87
    %p98 = scmp.eq.s32.totalorder %s18, 0
    %p99 = por %p97, %p98
    %p100 = scmp.ne.s32.totalorder %s86, %s87
    %p101 = scmp.eq.s32.totalorder %s19, 7
    %p102 = por %p100, %p101
    %p104 = scmp.ne.s32.totalorder %s87, %s103
    %p105 = scmp.eq.s32.totalorder %s19, 0
    %p106 = por %p104, %p105
    %s107 = ssub.s32 %s20, %s46
    %s108 = ssub.s32 %s21, %s42
    %s109 = sor.u32 %s107, %s108
    %s110 = ssub.s32 %s23, %s34
    %s111 = sor.u32 %s109, %s110
    %p112 = scmp.eq.s32.totalorder %s111, 0
    %s114 = sadd.s32 %s113, 1
    %s115 = scalar_select %p112, %s113, %s114
    %p118 = pneg %p112
    %p119 = scmp.eq.s32.totalorder %s13, 7
    %p120 = por %p118, %p119
    %p121 = scmp.ne.s32.totalorder %s113, %s116
    %p122 = scmp.eq.s32.totalorder %s13, 0
    %p123 = por %p121, %p122
    %p124 = scmp.ne.s32.totalorder %s113, %s116
    %p125 = scmp.eq.s32.totalorder %s18, 7
    %p126 = por %p124, %p125
    %p127 = scmp.ne.s32.totalorder %s116, %s117
    %p128 = scmp.eq.s32.totalorder %s18, 0
    %p129 = por %p127, %p128
    %p130 = scmp.ne.s32.totalorder %s116, %s117
    %p131 = scmp.eq.s32.totalorder %s19, 7
    %p132 = por %p130, %p131
    %p134 = scmp.ne.s32.totalorder %s117, %s133
    %p135 = scmp.eq.s32.totalorder %s19, 0
    %p136 = por %p134, %p135
    %s137 = ssub.s32 %s22, %s38
    %p138 = scmp.eq.s32.totalorder %s137, 0
    %s140 = sadd.s32 %s139, 1
    %s141 = scalar_select %p138, %s139, %s140
    %p144 = pneg %p138
    %p145 = scmp.eq.s32.totalorder %s13, 7
    %p146 = por %p144, %p145
    %p147 = scmp.ne.s32.totalorder %s139, %s142
    %p148 = scmp.eq.s32.totalorder %s13, 0
    %p149 = por %p147, %p148
    %p150 = scmp.ne.s32.totalorder %s139, %s142
    %p151 = scmp.eq.s32.totalorder %s18, 7
    %p152 = por %p150, %p151
    %p153 = scmp.ne.s32.totalorder %s142, %s143
    %p154 = scmp.eq.s32.totalorder %s18, 0
    %p155 = por %p153, %p154
    %p156 = scmp.ne.s32.totalorder %s142, %s143
    %p157 = scmp.eq.s32.totalorder %s19, 7
    %p158 = por %p156, %p157
    %p160 = scmp.ne.s32.totalorder %s143, %s159
    %p161 = scmp.eq.s32.totalorder %s19, 0
    %p162 = por %p160, %p161
    %s163 = ssub.s32 %s22, %s38
    %p164 = scmp.eq.s32.totalorder %s163, 0
    %s166 = sadd.s32 %s165, 1
    %s167 = scalar_select %p164, %s165, %s166
    %p170 = pneg %p164
    %p171 = scmp.eq.s32.totalorder %s13, 7
    %p172 = por %p170, %p171
    %p173 = scmp.ne.s32.totalorder %s165, %s168
    %p174 = scmp.eq.s32.totalorder %s13, 0
    %p175 = por %p173, %p174
    %p176 = scmp.ne.s32.totalorder %s165, %s168
    %p177 = scmp.eq.s32.totalorder %s18, 7
    %p178 = por %p176, %p177
    %p179 = scmp.ne.s32.totalorder %s168, %s169
    %p180 = scmp.eq.s32.totalorder %s18, 0
    %p181 = por %p179, %p180
    %p182 = scmp.ne.s32.totalorder %s168, %s169
    %p183 = scmp.eq.s32.totalorder %s19, 7
    %p184 = por %p182, %p183
    %p186 = scmp.ne.s32.totalorder %s169, %s185
    %p187 = scmp.eq.s32.totalorder %s19, 0
    %p188 = por %p186, %p187
    %s189 = ssub.s32 %s23, %s34
    %p190 = scmp.eq.s32.totalorder %s189, 0
    %s192 = sadd.s32 %s191, 1
    %s193 = scalar_select %p190, %s191, %s192
    %p196 = pneg %p190
    %p197 = scmp.eq.s32.totalorder %s13, 7
    %p198 = por %p196, %p197
    %p199 = scmp.ne.s32.totalorder %s191, %s194
    %p200 = scmp.eq.s32.totalorder %s13, 0
    %p201 = por %p199, %p200
    %p202 = scmp.ne.s32.totalorder %s191, %s194
    %p203 = scmp.eq.s32.totalorder %s18, 7
    %p204 = por %p202, %p203
    %p205 = scmp.ne.s32.totalorder %s194, %s195
    %p206 = scmp.eq.s32.totalorder %s18, 0
    %p207 = por %p205, %p206
    %p208 = scmp.ne.s32.totalorder %s194, %s195
    %p209 = scmp.eq.s32.totalorder %s19, 7
    %p210 = por %p208, %p209
    %p212 = scmp.ne.s32.totalorder %s195, %s211
    %p213 = scmp.eq.s32.totalorder %s19, 0
    %p214 = por %p212, %p213
    %s215 = ssub.s32 %s23, %s34
    %p216 = scmp.eq.s32.totalorder %s215, 0
    %s218 = sadd.s32 %s217, 1
    %s219 = scalar_select %p216, %s217, %s218
    %p222 = pneg %p216
    %p223 = scmp.eq.s32.totalorder %s13, 7
    %p224 = por %p222, %p223
    %p225 = scmp.ne.s32.totalorder %s217, %s220
    %p226 = scmp.eq.s32.totalorder %s13, 0
    %p227 = por %p225, %p226
    %p228 = scmp.ne.s32.totalorder %s217, %s220
    %p229 = scmp.eq.s32.totalorder %s18, 7
    %p230 = por %p228, %p229
    %p231 = scmp.ne.s32.totalorder %s220, %s221
    %p232 = scmp.eq.s32.totalorder %s18, 0
    %p233 = por %p231, %p232
    %p234 = scmp.ne.s32.totalorder %s220, %s221
    %p235 = scmp.eq.s32.totalorder %s19, 7
    %p236 = por %p234, %p235
    %p238 = scmp.ne.s32.totalorder %s221, %s237
    %p239 = scmp.eq.s32.totalorder %s19, 0
    %p240 = por %p238, %p239
    %s241 = ssub.s32 %s20, %s46
    %s242 = ssub.s32 %s21, %s42
    %s243 = sor.u32 %s241, %s242
    %s244 = ssub.s32 %s22, %s38
    %s245 = sor.u32 %s243, %s244
    %p246 = scmp.eq.s32.totalorder %s245, 0
    %s248 = sadd.s32 %s247, 1
    %s249 = scalar_select %p246, %s247, %s248
    %p252 = pneg %p246
    %p253 = scmp.eq.s32.totalorder %s13, 7
    %p254 = por %p252, %p253
    %p255 = scmp.ne.s32.totalorder %s247, %s250
    %p256 = scmp.eq.s32.totalorder %s13, 0
    %p257 = por %p255, %p256
    %p258 = scmp.ne.s32.totalorder %s247, %s250
    %p259 = scmp.eq.s32.totalorder %s18, 7
    %p260 = por %p258, %p259
    %p261 = scmp.ne.s32.totalorder %s250, %s251
    %p262 = scmp.eq.s32.totalorder %s18, 0
    %p263 = por %p261, %p262
    %p264 = scmp.ne.s32.totalorder %s250, %s251
    %p265 = scmp.eq.s32.totalorder %s19, 7
    %p266 = por %p264, %p265
    %p268 = scmp.ne.s32.totalorder %s251, %s267
    %p269 = scmp.eq.s32.totalorder %s19, 0
    %p270 = por %p268, %p269
    %p271 = scmp.le.s32.totalorder 1, %s13
    %p272 = scmp.lt.s32.totalorder %s13, 9
    %p273 = pnand %p271, %p272
    %p274 = pneg %p273
    // Predicated region
    $region9: #{flux_joint_attention.7} parent=5 // pred_check
      _
    $region10: #{flux_joint_attention.7} parent=5 // pred_check_branch
      %276 = sbr.rel (%p273) target = $region12
    $region11: #{flux_joint_attention.7} parent=5 // pred_region
      %s277 = ssub.s32 %s13, 1
      // Predicated region
      $region13: #{flux_joint_attention.7} parent=11 // pred_check
        %p278 = pneg %p155
      $region14: #{flux_joint_attention.7} parent=11 // pred_check_branch
        %280 = sbr.rel (%p278) target = $region16
      $region15: #{flux_joint_attention.7} parent=11 // pred_region
        %s281 = smul.u32 3, %s26
        %p282 = scmp.lt.s32.totalorder %s281, 2
        %s283 = scalar_select %p282, %s281, 2
        %s284 = smul.addr %s283, 8
        %s285 = scalar_lea.vmem %s3, %s284
        %s286 = smul.u32 3, %s26
      $region16: #{flux_joint_attention.7} parent=11 // pred_fallthru
        _
      // Predicated region
      $region17: #{flux_joint_attention.7} parent=11 // pred_check
        %p287 = pneg %p181
      $region18: #{flux_joint_attention.7} parent=11 // pred_check_branch
        %289 = sbr.rel (%p287) target = $region20
      $region19: #{flux_joint_attention.7} parent=11 // pred_region
        %s290 = smul.u32 3, %s26
        %p291 = scmp.lt.s32.totalorder %s290, 2
        %s292 = scalar_select %p291, %s290, 2
        %s293 = smul.addr %s292, 8
        %s294 = scalar_lea.vmem %s4, %s293
        %s295 = smul.u32 3, %s26
      $region20: #{flux_joint_attention.7} parent=11 // pred_fallthru
        _
      // Predicated region
      $region21: #{flux_joint_attention.7} parent=11 // pred_check
        %p296 = pneg %p207
      $region22: #{flux_joint_attention.7} parent=11 // pred_check_branch
        %298 = sbr.rel (%p296) target = $region24
      $region23: #{flux_joint_attention.7} parent=11 // pred_region
        %s299 = smul.u32 3, %s27
        %p300 = scmp.lt.s32.totalorder %s299, 2
        %s301 = scalar_select %p300, %s299, 2
        %s302 = smul.addr %s301, 8
        %s303 = scalar_lea.vmem %s5, %s302
        %s304 = smul.u32 3, %s27
      $region24: #{flux_joint_attention.7} parent=11 // pred_fallthru
        _
      // Predicated region
      $region25: #{flux_joint_attention.7} parent=11 // pred_check
        %p305 = pneg %p233
      $region26: #{flux_joint_attention.7} parent=11 // pred_check_branch
        %307 = sbr.rel (%p305) target = $region28
      $region27: #{flux_joint_attention.7} parent=11 // pred_region
        %s308 = smul.u32 3, %s27
        %p309 = scmp.lt.s32.totalorder %s308, 2
        %s310 = scalar_select %p309, %s308, 2
        %s311 = smul.addr %s310, 8
        %s312 = scalar_lea.vmem %s6, %s311
        %s313 = smul.u32 3, %s27
      $region28: #{flux_joint_attention.7} parent=11 // pred_fallthru
        _
    $region12: #{flux_joint_attention.7} parent=5 // pred_fallthru
      _
    %p314 = scmp.lt.s32.totalorder %s13, 8
    // Predicated region
    $region29: #{flux_joint_attention.7} parent=5 // pred_check
      %p315 = pneg %p314
    $region30: #{flux_joint_attention.7} parent=5 // pred_check_branch
      %317 = sbr.rel (%p315) target = $region32
    $region31: #{flux_joint_attention.7} parent=5 // pred_region
      // Predicated region
      $region33: #{flux_joint_attention.7} parent=31 // pred_check
        %p318 = pneg %p63
      $region34: #{flux_joint_attention.7} parent=31 // pred_check_branch
        %320 = sbr.rel (%p318) target = $region36
      $region35: #{flux_joint_attention.7} parent=31 // pred_region
        %s321 = smul.u32 3, %s22
        %p322 = scmp.lt.s32.totalorder %s20, 1
        %s323 = scalar_select %p322, %s20, 1
        %p324 = scmp.lt.s32.totalorder %s21, 3
        %s325 = scalar_select %p324, %s21, 3
        %p326 = scmp.lt.s32.totalorder %s321, 2
        %s327 = scalar_select %p326, %s321, 2
        %s328 = smul.addr %s325, 3
        %s329 = sadd.s32 %s327, %s328
        %s330 = smul.addr %s323, 12
        %s331 = sadd.s32 %s329, %s330
        %s332 = smul.addr %s331, 8
        %s333 = scalar_lea.vmem %s0, %s332
        %s334 = smul.u32 3, %s22
      $region36: #{flux_joint_attention.7} parent=31 // pred_fallthru
        _
      // Predicated region
      $region37: #{flux_joint_attention.7} parent=31 // pred_check
        %p335 = pneg %p93
      $region38: #{flux_joint_attention.7} parent=31 // pred_check_branch
        %337 = sbr.rel (%p335) target = $region40
      $region39: #{flux_joint_attention.7} parent=31 // pred_region
        %s338 = smul.u32 3, %s23
        %p339 = scmp.lt.s32.totalorder %s20, 1
        %s340 = scalar_select %p339, %s20, 1
        %p341 = scmp.lt.s32.totalorder %s21, 3
        %s342 = scalar_select %p341, %s21, 3
        %p343 = scmp.lt.s32.totalorder %s338, 2
        %s344 = scalar_select %p343, %s338, 2
        %s345 = smul.addr %s342, 3
        %s346 = sadd.s32 %s344, %s345
        %s347 = smul.addr %s340, 12
        %s348 = sadd.s32 %s346, %s347
        %s349 = smul.addr %s348, 8
        %s350 = scalar_lea.vmem %s1, %s349
        %s351 = smul.u32 3, %s23
      $region40: #{flux_joint_attention.7} parent=31 // pred_fallthru
        _
      // Predicated region
      $region41: #{flux_joint_attention.7} parent=31 // pred_check
        %p352 = pneg %p123
      $region42: #{flux_joint_attention.7} parent=31 // pred_check_branch
        %354 = sbr.rel (%p352) target = $region44
      $region43: #{flux_joint_attention.7} parent=31 // pred_region
        %s355 = smul.u32 3, %s23
        %p356 = scmp.lt.s32.totalorder %s20, 1
        %s357 = scalar_select %p356, %s20, 1
        %p358 = scmp.lt.s32.totalorder %s21, 3
        %s359 = scalar_select %p358, %s21, 3
        %p360 = scmp.lt.s32.totalorder %s355, 2
        %s361 = scalar_select %p360, %s355, 2
        %s362 = smul.addr %s359, 3
        %s363 = sadd.s32 %s361, %s362
        %s364 = smul.addr %s357, 12
        %s365 = sadd.s32 %s363, %s364
        %s366 = smul.addr %s365, 8
        %s367 = scalar_lea.vmem %s2, %s366
        %s368 = smul.u32 3, %s23
      $region44: #{flux_joint_attention.7} parent=31 // pred_fallthru
        _
    $region32: #{flux_joint_attention.7} parent=5 // pred_fallthru
      _
    %p369 = scmp.le.s32.totalorder 1, %s13
    %p370 = scmp.lt.s32.totalorder %s13, 9
    %p371 = pnand %p369, %p370
    %p372 = pneg %p371
    // Predicated region
    $region45: #{flux_joint_attention.7} parent=5 // pred_check
      _
    $region46: #{flux_joint_attention.7} parent=5 // pred_check_branch
      %374 = sbr.rel (%p371) target = $region48
    $region47: #{flux_joint_attention.7} parent=5 // pred_region
      %s375 = ssub.s32 %s13, 1
      %s376 = smul.u32 3, %s26
      %p377 = scmp.lt.s32.totalorder %s24, 1
      %s378 = scalar_select %p377, %s24, 1
      %p379 = scmp.lt.s32.totalorder %s25, 3
      %s380 = scalar_select %p379, %s25, 3
      %p381 = scmp.lt.s32.totalorder %s376, 2
      %s382 = scalar_select %p381, %s376, 2
      %s383 = smul.addr %s380, 3
      %s384 = sadd.s32 %s382, %s383
      %s385 = smul.addr %s378, 12
      %s386 = sadd.s32 %s384, %s385
      %s387 = smul.addr %s386, 8
      %s388 = scalar_lea.vmem %s0, %s387
      %p389 = pneg %p69
      %p390 = pneg %p66
      %s391 = smul.u32 3, %s27
      %p392 = scmp.lt.s32.totalorder %s24, 1
      %s393 = scalar_select %p392, %s24, 1
      %p394 = scmp.lt.s32.totalorder %s25, 3
      %s395 = scalar_select %p394, %s25, 3
      %p396 = scmp.lt.s32.totalorder %s391, 2
      %s397 = scalar_select %p396, %s391, 2
      %s398 = smul.addr %s395, 3
      %s399 = sadd.s32 %s397, %s398
      %s400 = smul.addr %s393, 12
      %s401 = sadd.s32 %s399, %s400
      %s402 = smul.addr %s401, 8
      %s403 = scalar_lea.vmem %s1, %s402
      %p404 = pneg %p99
      %p405 = pneg %p96
      %s406 = smul.u32 3, %s27
      %p407 = scmp.lt.s32.totalorder %s24, 1
      %s408 = scalar_select %p407, %s24, 1
      %p409 = scmp.lt.s32.totalorder %s25, 3
      %s410 = scalar_select %p409, %s25, 3
      %p411 = scmp.lt.s32.totalorder %s406, 2
      %s412 = scalar_select %p411, %s406, 2
      %s413 = smul.addr %s410, 3
      %s414 = sadd.s32 %s412, %s413
      %s415 = smul.addr %s408, 12
      %s416 = sadd.s32 %s414, %s415
      %s417 = smul.addr %s416, 8
      %s418 = scalar_lea.vmem %s2, %s417
      %p419 = pneg %p129
      %p420 = pneg %p126
      %s421 = smul.u32 3, %s26
      %p422 = scmp.lt.s32.totalorder %s421, 2
      %s423 = scalar_select %p422, %s421, 2
      %s424 = smul.addr %s423, 8
      %s425 = scalar_lea.vmem %s3, %s424
      %p426 = pneg %p155
      %p427 = pneg %p152
      %s428 = smul.u32 3, %s26
      %p429 = scmp.lt.s32.totalorder %s428, 2
      %s430 = scalar_select %p429, %s428, 2
      %s431 = smul.addr %s430, 8
      %s432 = scalar_lea.vmem %s4, %s431
      %p433 = pneg %p181
      %p434 = pneg %p178
      %s435 = smul.u32 3, %s27
      %p436 = scmp.lt.s32.totalorder %s435, 2
      %s437 = scalar_select %p436, %s435, 2
      %s438 = smul.addr %s437, 8
      %s439 = scalar_lea.vmem %s5, %s438
      %p440 = pneg %p207
      %p441 = pneg %p204
      %s442 = smul.u32 3, %s27
      %p443 = scmp.lt.s32.totalorder %s442, 2
      %s444 = scalar_select %p443, %s442, 2
      %s445 = smul.addr %s444, 8
      %s446 = scalar_lea.vmem %s6, %s445
      %p447 = pneg %p233
      %p448 = pneg %p230
      %p449 = pneg %p263
      %p450 = pneg %p260
      %s451 = smul.u32 3, %s26
      %p452 = scmp.lt.s32.totalorder %s24, 1
      %s453 = scalar_select %p452, %s24, 1
      %p454 = scmp.lt.s32.totalorder %s25, 3
      %s455 = scalar_select %p454, %s25, 3
      %p456 = scmp.lt.s32.totalorder %s451, 2
      %s457 = scalar_select %p456, %s451, 2
      %s458 = smul.addr %s455, 3
      %s459 = sadd.s32 %s457, %s458
      %s460 = smul.addr %s453, 12
      %s461 = sadd.s32 %s459, %s460
      %s462 = smul.addr %s461, 8
      %s463 = scalar_lea.vmem %s7, %s462
      %s464 = smul.u32 3, %s26
      %p465 = scmp.lt.s32.totalorder %s24, 1
      %s466 = scalar_select %p465, %s24, 1
      %p467 = scmp.lt.s32.totalorder %s25, 3
      %s468 = scalar_select %p467, %s25, 3
      %p469 = scmp.lt.s32.totalorder %s464, 2
      %s470 = scalar_select %p469, %s464, 2
      %s471 = smul.addr %s468, 3
      %s472 = sadd.s32 %s470, %s471
      %s473 = smul.addr %s466, 12
      %s474 = sadd.s32 %s472, %s473
      %s475 = smul.addr %s474, 8
      %s476 = scalar_lea.vmem %s0, %s475
      %s477 = smul.u32 3, %s26
      %s478 = smul.u32 3, %s27
      %p479 = scmp.lt.s32.totalorder %s24, 1
      %s480 = scalar_select %p479, %s24, 1
      %p481 = scmp.lt.s32.totalorder %s25, 3
      %s482 = scalar_select %p481, %s25, 3
      %p483 = scmp.lt.s32.totalorder %s478, 2
      %s484 = scalar_select %p483, %s478, 2
      %s485 = smul.addr %s482, 3
      %s486 = sadd.s32 %s484, %s485
      %s487 = smul.addr %s480, 12
      %s488 = sadd.s32 %s486, %s487
      %s489 = smul.addr %s488, 8
      %s490 = scalar_lea.vmem %s1, %s489
      %s491 = smul.u32 3, %s27
      %s492 = smul.u32 3, %s27
      %p493 = scmp.lt.s32.totalorder %s24, 1
      %s494 = scalar_select %p493, %s24, 1
      %p495 = scmp.lt.s32.totalorder %s25, 3
      %s496 = scalar_select %p495, %s25, 3
      %p497 = scmp.lt.s32.totalorder %s492, 2
      %s498 = scalar_select %p497, %s492, 2
      %s499 = smul.addr %s496, 3
      %s500 = sadd.s32 %s498, %s499
      %s501 = smul.addr %s494, 12
      %s502 = sadd.s32 %s500, %s501
      %s503 = smul.addr %s502, 8
      %s504 = scalar_lea.vmem %s2, %s503
      %s505 = smul.u32 3, %s27
      %s506 = smul.u32 3, %s26
      %p507 = scmp.lt.s32.totalorder %s506, 2
      %s508 = scalar_select %p507, %s506, 2
      %s509 = smul.addr %s508, 8
      %s510 = scalar_lea.vmem %s3, %s509
      %s511 = smul.u32 3, %s26
      %s512 = smul.u32 3, %s26
      %p513 = scmp.lt.s32.totalorder %s512, 2
      %s514 = scalar_select %p513, %s512, 2
      %s515 = smul.addr %s514, 8
      %s516 = scalar_lea.vmem %s4, %s515
      %s517 = smul.u32 3, %s26
      %s518 = smul.u32 3, %s27
      %p519 = scmp.lt.s32.totalorder %s518, 2
      %s520 = scalar_select %p519, %s518, 2
      %s521 = smul.addr %s520, 8
      %s522 = scalar_lea.vmem %s5, %s521
      %s523 = smul.u32 3, %s27
      %s524 = smul.u32 3, %s27
      %p525 = scmp.lt.s32.totalorder %s524, 2
      %s526 = scalar_select %p525, %s524, 2
      %s527 = smul.addr %s526, 8
      %s528 = scalar_lea.vmem %s6, %s527
      %s529 = smul.u32 3, %s27
      %s530 = smul.u32 3, %s26
      %p531 = scmp.lt.s32.totalorder %s24, 1
      %s532 = scalar_select %p531, %s24, 1
      %p533 = scmp.lt.s32.totalorder %s25, 3
      %s534 = scalar_select %p533, %s25, 3
      %p535 = scmp.lt.s32.totalorder %s530, 2
      %s536 = scalar_select %p535, %s530, 2
      %s537 = smul.addr %s534, 3
      %s538 = sadd.s32 %s536, %s537
      %s539 = smul.addr %s532, 12
      %s540 = sadd.s32 %s538, %s539
      %s541 = smul.addr %s540, 8
      %s542 = scalar_lea.vmem %s7, %s541
      %s543 = smul.u32 3, %s26
      %p544 = scmp.eq.s32.totalorder %s27, 0
      // Predicated region
      $region49: #{flux_joint_attention.7} parent=47 // pred_check
        %p545 = pneg %p544
      $region50: #{flux_joint_attention.7} parent=47 // pred_check_branch
        %547 = sbr.rel (%p545) target = $region52
      $region51: #{flux_joint_attention.7} parent=47 // pred_region
        %v548 = vld [vmem:[%s476] sm:$0xff]
        %v549 = vld [vmem:[%s476 + $0x8] sm:$0xff]
        %v550 = vld [vmem:[%s476 + $0x10] sm:$0xff]
        %v551 = vld [vmem:[%s510] sm:$0xff]
        %v552 = vld [vmem:[%s510 + $0x8] sm:$0xff]
        %v553 = vld [vmem:[%s510 + $0x10] sm:$0xff]
        %v554 = vld [vmem:[%s516] sm:$0xff]
        %v555 = vld [vmem:[%s516 + $0x8] sm:$0xff]
        %v556 = vld [vmem:[%s516 + $0x10] sm:$0xff]
        %v557 = vmul.f32 %v548, %v548
        %v558 = vmul.f32 %v549, %v549
        %v559 = vmul.f32 %v550, %v550
        %vm560 = vcmask 130048
        %v561 = vsel %vm560, %v557, 0.0
        %562 = vadd.xlane.f32.xlu0 %v561
        %v563 = vpop.xlane.xlu0 %562
        %v564 = vsel %vm560, %v558, 0.0
        %565 = vadd.xlane.f32.xlu0 %v564
        %v566 = vpop.xlane.xlu0 %565
        %v567 = vsel %vm560, %v559, 0.0
        %568 = vadd.xlane.f32.xlu0 %v567
        %v569 = vpop.xlane.xlu0 %568
        %v570 = vrcp.pop 16.0
        %v571 = vmul.f32 16.0, %v570
        %v572 = vsub.f32 1.0, %v571
        %v573 = vmul.f32 %v570, %v572
        %v574 = vadd.f32 %v570, %v573
        %vm575 = vweird.f32 %v570
        %v576 = vsel %vm575, %v570, %v574
        %v577 = vmul.f32 %v563, %v576
        %v578 = vmul.f32 %v566, %v576
        %v579 = vmul.f32 %v569, %v576
        %v580 = vadd.f32 %v577, 1e-06
        %v581 = vadd.f32 %v578, 1e-06
        %v582 = vadd.f32 %v579, 1e-06
        %v583 = vrsqrt.pop %v580
        %v584 = vmul.f32 %v583, %v580
        %v585 = vmul.f32 %v584, %v583
        %v586 = vmul.f32 0.5, %v585
        %v587 = vsub.f32 1.5, %v586
        %v588 = vmul.f32 %v583, %v587
        %vm589 = vweird.f32 %v580
        %vm590 = vweird.f32 %v583
        %vm591 = vmor %vm589, %vm590
        %v592 = vsel %vm591, %v583, %v588
        %v593 = vrsqrt.pop %v581
        %v594 = vmul.f32 %v593, %v581
        %v595 = vmul.f32 %v594, %v593
        %v596 = vmul.f32 0.5, %v595
        %v597 = vsub.f32 1.5, %v596
        %v598 = vmul.f32 %v593, %v597
        %vm599 = vweird.f32 %v581
        %vm600 = vweird.f32 %v593
        %vm601 = vmor %vm599, %vm600
        %v602 = vsel %vm601, %v593, %v598
        %v603 = vrsqrt.pop %v582
        %v604 = vmul.f32 %v603, %v582
        %v605 = vmul.f32 %v604, %v603
        %v606 = vmul.f32 0.5, %v605
        %v607 = vsub.f32 1.5, %v606
        %v608 = vmul.f32 %v603, %v607
        %vm609 = vweird.f32 %v582
        %vm610 = vweird.f32 %v603
        %vm611 = vmor %vm609, %vm610
        %v612 = vsel %vm611, %v603, %v608
        %v613 = vmul.f32 %v548, %v592
        %v614 = vmul.f32 %v549, %v602
        %v615 = vmul.f32 %v550, %v612
        %619 = vrot.lane.b32.xlu0 %v613, 120
        %v620 = vpop.permute.xlu0 %619
        %621 = vrot.lane.b32.xlu0 %v614, 120
        %v622 = vpop.permute.xlu0 %621
        %623 = vrot.lane.b32.xlu0 %v615, 120
        %v624 = vpop.permute.xlu0 %623
        %628 = vrot.lane.b32.xlu0 %v613, 8
        %v629 = vpop.permute.xlu0 %628
        %630 = vrot.lane.b32.xlu0 %v614, 8
        %v631 = vpop.permute.xlu0 %630
        %632 = vrot.lane.b32.xlu0 %v615, 8
        %v633 = vpop.permute.xlu0 %632
        %vm637 = vcmask 64512
        %v638 = vsel %vm637, %v620, %v629
        %v639 = vsel %vm637, %v622, %v631
        %v640 = vsel %vm637, %v624, %v633
        %v641 = vmul.f32 %v551, %v613
        %v642 = vmul.f32 %v552, %v614
        %v643 = vmul.f32 %v553, %v615
        %v644 = vmul.f32 %v554, %v638
        %v645 = vmul.f32 %v555, %v639
        %v646 = vmul.f32 %v556, %v640
        %v647 = vadd.f32 %v641, %v644
        %v648 = vadd.f32 %v642, %v645
        %v649 = vadd.f32 %v643, %v646
        %v650 = vmul.f32 %v647, 0.25
        %v651 = vmul.f32 %v648, 0.25
        %v652 = vmul.f32 %v649, 0.25
        %653 = vst.msk [vmem:[#allocation5] sm:$0xff] %vm560, %v650
        %654 = vst.msk [vmem:[#allocation5 + $0x8] sm:$0xff] %vm560, %v651
        %655 = vst.msk [vmem:[#allocation5 + $0x10] sm:$0xff] %vm560, %v652
        %vm656 = vcmask 7168
        %657 = vst.msk [vmem:[#allocation2] sm:$0xff] %vm656, -inf
        %658 = vst.msk [vmem:[#allocation2 + $0x8] sm:$0xff] %vm656, -inf
        %659 = vst.msk [vmem:[#allocation2 + $0x10] sm:$0xff] %vm656, -inf
        %660 = vst.msk [vmem:[#allocation3] sm:$0xff] %vm656, 0.0
        %661 = vst.msk [vmem:[#allocation3 + $0x8] sm:$0xff] %vm656, 0.0
        %662 = vst.msk [vmem:[#allocation3 + $0x10] sm:$0xff] %vm656, 0.0
        %663 = vst.msk [vmem:[#allocation4] sm:$0xff] %vm560, 0.0
        %664 = vst.msk [vmem:[#allocation4 + $0x8] sm:$0xff] %vm560, 0.0
        %665 = vst.msk [vmem:[#allocation4 + $0x10] sm:$0xff] %vm560, 0.0
      $region52: #{flux_joint_attention.7} parent=47 // pred_fallthru
        _
      %v666 = vld [vmem:[%s490] sm:$0xff]
      %v667 = vld [vmem:[%s490 + $0x8] sm:$0xff]
      %v668 = vld [vmem:[%s490 + $0x10] sm:$0xff]
      %v669 = vld [vmem:[%s522] sm:$0xff]
      %v670 = vld [vmem:[%s522 + $0x8] sm:$0xff]
      %v671 = vld [vmem:[%s522 + $0x10] sm:$0xff]
      %v672 = vld [vmem:[%s528] sm:$0xff]
      %v673 = vld [vmem:[%s528 + $0x8] sm:$0xff]
      %v674 = vld [vmem:[%s528 + $0x10] sm:$0xff]
      %v675 = vmul.f32 %v666, %v666
      %v676 = vmul.f32 %v667, %v667
      %v677 = vmul.f32 %v668, %v668
      %vm678 = vcmask 130048
      %v679 = vsel %vm678, %v675, 0.0
      %680 = vadd.xlane.f32.xlu0 %v679
      %v681 = vpop.xlane.xlu0 %680
      %v682 = vsel %vm678, %v676, 0.0
      %683 = vadd.xlane.f32.xlu0 %v682
      %v684 = vpop.xlane.xlu0 %683
      %v685 = vsel %vm678, %v677, 0.0
      %686 = vadd.xlane.f32.xlu0 %v685
      %v687 = vpop.xlane.xlu0 %686
      %v688 = vrcp.pop 16.0
      %v689 = vmul.f32 16.0, %v688
      %v690 = vsub.f32 1.0, %v689
      %v691 = vmul.f32 %v688, %v690
      %v692 = vadd.f32 %v688, %v691
      %vm693 = vweird.f32 %v688
      %v694 = vsel %vm693, %v688, %v692
      %v695 = vmul.f32 %v681, %v694
      %v696 = vmul.f32 %v684, %v694
      %v697 = vmul.f32 %v687, %v694
      %v698 = vadd.f32 %v695, 1e-06
      %v699 = vadd.f32 %v696, 1e-06
      %v700 = vadd.f32 %v697, 1e-06
      %v701 = vrsqrt.pop %v698
      %v702 = vmul.f32 %v701, %v698
      %v703 = vmul.f32 %v702, %v701
      %v704 = vmul.f32 0.5, %v703
      %v705 = vsub.f32 1.5, %v704
      %v706 = vmul.f32 %v701, %v705
      %vm707 = vweird.f32 %v698
      %vm708 = vweird.f32 %v701
      %vm709 = vmor %vm707, %vm708
      %v710 = vsel %vm709, %v701, %v706
      %v711 = vrsqrt.pop %v699
      %v712 = vmul.f32 %v711, %v699
      %v713 = vmul.f32 %v712, %v711
      %v714 = vmul.f32 0.5, %v713
      %v715 = vsub.f32 1.5, %v714
      %v716 = vmul.f32 %v711, %v715
      %vm717 = vweird.f32 %v699
      %vm718 = vweird.f32 %v711
      %vm719 = vmor %vm717, %vm718
      %v720 = vsel %vm719, %v711, %v716
      %v721 = vrsqrt.pop %v700
      %v722 = vmul.f32 %v721, %v700
      %v723 = vmul.f32 %v722, %v721
      %v724 = vmul.f32 0.5, %v723
      %v725 = vsub.f32 1.5, %v724
      %v726 = vmul.f32 %v721, %v725
      %vm727 = vweird.f32 %v700
      %vm728 = vweird.f32 %v721
      %vm729 = vmor %vm727, %vm728
      %v730 = vsel %vm729, %v721, %v726
      %v731 = vmul.f32 %v666, %v710
      %v732 = vmul.f32 %v667, %v720
      %v733 = vmul.f32 %v668, %v730
      %737 = vrot.lane.b32.xlu0 %v731, 120
      %v738 = vpop.permute.xlu0 %737
      %739 = vrot.lane.b32.xlu0 %v732, 120
      %v740 = vpop.permute.xlu0 %739
      %741 = vrot.lane.b32.xlu0 %v733, 120
      %v742 = vpop.permute.xlu0 %741
      %746 = vrot.lane.b32.xlu0 %v731, 8
      %v747 = vpop.permute.xlu0 %746
      %748 = vrot.lane.b32.xlu0 %v732, 8
      %v749 = vpop.permute.xlu0 %748
      %750 = vrot.lane.b32.xlu0 %v733, 8
      %v751 = vpop.permute.xlu0 %750
      %vm755 = vcmask 64512
      %v756 = vsel %vm755, %v738, %v747
      %v757 = vsel %vm755, %v740, %v749
      %v758 = vsel %vm755, %v742, %v751
      %v759 = vmul.f32 %v669, %v731
      %v760 = vmul.f32 %v670, %v732
      %v761 = vmul.f32 %v671, %v733
      %v762 = vmul.f32 %v672, %v756
      %v763 = vmul.f32 %v673, %v757
      %v764 = vmul.f32 %v674, %v758
      %v765 = vadd.f32 %v759, %v762
      %v766 = vadd.f32 %v760, %v763
      %v767 = vadd.f32 %v761, %v764
      %v768 = vld [vmem:[#allocation5] sm:$0xff]
      %v769 = vld [vmem:[#allocation5 + $0x8] sm:$0xff]
      %v770 = vld [vmem:[#allocation5 + $0x10] sm:$0xff]
      %v772 = vsel %vm678, %v768, 0
      %v775 = vsel %vm678, %v769, 0
      %v778 = vsel %vm678, %v770, 0
      %v781 = vsel %vm678, %v765, 0
      %v784 = vsel %vm678, %v766, 0
      %v787 = vsel %vm678, %v767, 0
      %789 = vmatpush.xpose.msra.mxu0 0.0
      %790 = vmatpush.xpose.msra.mxu0 0.0
      %791 = vmatpush.xpose.msra.mxu0 0.0
      %792 = vmatpush.xpose.msra.mxu0 0.0
      %793 = vmatpush.xpose.msra.mxu0 0.0
      %794 = vmatpush.xpose.msra.mxu0 0.0
      %795 = vmatpush.xpose.msra.mxu0 0.0
      %796 = vmatpush.xpose.msra.mxu0 0.0
      %797 = vmatpush.xpose.msra.mxu0 0.0
      %798 = vmatpush.xpose.msra.mxu0 0.0
      %799 = vmatpush.xpose.msra.mxu0 0.0
      %800 = vmatpush.xpose.msra.mxu0 0.0
      %801 = vmatpush.xpose.msra.mxu0 0.0
      %802 = vmatpush.xpose.msra.mxu0 %v787
      %803 = vmatpush.xpose.msra.mxu0 %v784
      %804 = vmatpush.xpose.msra.mxu0 %v781
      %805 = vmatmul.f32.gmra.mxu0 %v772
      %v806 = vpop.f32.mrf.mxu0
      %v807 = vadd.f32 0.0, %v806
      %808 = vmatmul.f32.gmra.mxu0 %v775
      %v809 = vpop.f32.mrf.mxu0
      %v810 = vadd.f32 0.0, %v809
      %811 = vmatmul.f32.gmra.mxu0 %v778
      %v812 = vpop.f32.mrf.mxu0
      %v813 = vadd.f32 0.0, %v812
      %814 = vdwg.mxu0
      %v815 = vld [vmem:[#allocation2] sm:$0xff]
      %v816 = vld [vmem:[#allocation2 + $0x8] sm:$0xff]
      %v817 = vld [vmem:[#allocation2 + $0x10] sm:$0xff]
      %vm818 = vcmask 195584
      %v819 = vsel %vm818, %v807, -inf
      %820 = vmax.xlane.f32.xlu0 %v819
      %v821 = vpop.xlane.xlu0 %820
      %v822 = vsel %vm818, %v810, -inf
      %823 = vmax.xlane.f32.xlu0 %v822
      %v824 = vpop.xlane.xlu0 %823
      %v825 = vsel %vm818, %v813, -inf
      %826 = vmax.xlane.f32.xlu0 %v825
      %v827 = vpop.xlane.xlu0 %826
      %v828 = vmax.f32 %v815, %v821
      %v829 = vmax.f32 %v816, %v824
      %v830 = vmax.f32 %v817, %v827
      %v831 = vsub.f32 %v815, %v828
      %v832 = vsub.f32 %v816, %v829
      %v833 = vsub.f32 %v817, %v830
      %v834 = vmul.f32 %v831, 1.442695
      %v835 = vpow.pop %v834
      %v836 = vmul.f32 %v832, 1.442695
      %v837 = vpow.pop %v836
      %v838 = vmul.f32 %v833, 1.442695
      %v839 = vpow.pop %v838
      %841 = vset.pattern.permute.xlu0 0
      %842 = vperm.xlu0 %841, %v828
      %v843 = vpop.permute.xlu0 %842
      %846 = vset.pattern.permute.xlu0 0
      %847 = vperm.xlu0 %846, %v829
      %v848 = vpop.permute.xlu0 %847
      %851 = vset.pattern.permute.xlu0 0
      %852 = vperm.xlu0 %851, %v830
      %v853 = vpop.permute.xlu0 %852
      %v855 = vsub.f32 %v807, %v843
      %v856 = vsub.f32 %v810, %v848
      %v857 = vsub.f32 %v813, %v853
      %v858 = vmul.f32 %v855, 1.442695
      %v859 = vpow.pop %v858
      %v860 = vmul.f32 %v856, 1.442695
      %v861 = vpow.pop %v860
      %v862 = vmul.f32 %v857, 1.442695
      %v863 = vpow.pop %v862
      %v864 = vld [vmem:[#allocation3] sm:$0xff]
      %v865 = vld [vmem:[#allocation3 + $0x8] sm:$0xff]
      %v866 = vld [vmem:[#allocation3 + $0x10] sm:$0xff]
      %v867 = vmul.f32 %v835, %v864
      %v868 = vmul.f32 %v837, %v865
      %v869 = vmul.f32 %v839, %v866
      %v870 = vsel %vm818, %v859, 0.0
      %871 = vadd.xlane.f32.xlu0 %v870
      %v872 = vpop.xlane.xlu0 %871
      %v873 = vsel %vm818, %v861, 0.0
      %874 = vadd.xlane.f32.xlu0 %v873
      %v875 = vpop.xlane.xlu0 %874
      %v876 = vsel %vm818, %v863, 0.0
      %877 = vadd.xlane.f32.xlu0 %v876
      %v878 = vpop.xlane.xlu0 %877
      %v879 = vadd.f32 %v867, %v872
      %v880 = vadd.f32 %v868, %v875
      %v881 = vadd.f32 %v869, %v878
      %vm882 = vcmask 7168
      %883 = vst.msk [vmem:[#allocation3] sm:$0xff] %vm882, %v879
      %884 = vst.msk [vmem:[#allocation3 + $0x8] sm:$0xff] %vm882, %v880
      %885 = vst.msk [vmem:[#allocation3 + $0x10] sm:$0xff] %vm882, %v881
      %v886 = vld [vmem:[#allocation4] sm:$0xff]
      %v887 = vld [vmem:[#allocation4 + $0x8] sm:$0xff]
      %v888 = vld [vmem:[#allocation4 + $0x10] sm:$0xff]
      %890 = vset.pattern.permute.xlu0 0
      %891 = vperm.xlu0 %890, %v835
      %v892 = vpop.permute.xlu0 %891
      %895 = vset.pattern.permute.xlu0 0
      %896 = vperm.xlu0 %895, %v837
      %v897 = vpop.permute.xlu0 %896
      %900 = vset.pattern.permute.xlu0 0
      %901 = vperm.xlu0 %900, %v839
      %v902 = vpop.permute.xlu0 %901
      %v904 = vmul.f32 %v892, %v886
      %v905 = vmul.f32 %v897, %v887
      %v906 = vmul.f32 %v902, %v888
      %v907 = vld [vmem:[%s504] sm:$0xff]
      %v908 = vld [vmem:[%s504 + $0x8] sm:$0xff]
      %v909 = vld [vmem:[%s504 + $0x10] sm:$0xff]
      %v911 = vsel %vm818, %v859, 0
      %v914 = vsel %vm818, %v861, 0
      %v917 = vsel %vm818, %v863, 0
      %919 = vmatpush.msra.mxu0 0.0
      %920 = vmatpush.msra.mxu0 0.0
      %921 = vmatpush.msra.mxu0 0.0
      %922 = vmatpush.msra.mxu0 0.0
      %923 = vmatpush.msra.mxu0 0.0
      %924 = vmatpush.msra.mxu0 0.0
      %925 = vmatpush.msra.mxu0 0.0
      %926 = vmatpush.msra.mxu0 0.0
      %927 = vmatpush.msra.mxu0 0.0
      %928 = vmatpush.msra.mxu0 0.0
      %929 = vmatpush.msra.mxu0 0.0
      %930 = vmatpush.msra.mxu0 0.0
      %931 = vmatpush.msra.mxu0 0.0
      %932 = vmatpush.msra.mxu0 %v909
      %933 = vmatpush.msra.mxu0 %v908
      %934 = vmatpush.msra.mxu0 %v907
      %935 = vmatmul.f32.gmra.mxu0 %v911
      %v936 = vpop.f32.mrf.mxu0
      %v937 = vadd.f32 0.0, %v936
      %938 = vmatmul.f32.gmra.mxu0 %v914
      %v939 = vpop.f32.mrf.mxu0
      %v940 = vadd.f32 0.0, %v939
      %941 = vmatmul.f32.gmra.mxu0 %v917
      %v942 = vpop.f32.mrf.mxu0
      %v943 = vadd.f32 0.0, %v942
      %944 = vdwg.mxu0
      %v945 = vadd.f32 %v904, %v937
      %v946 = vadd.f32 %v905, %v940
      %v947 = vadd.f32 %v906, %v943
      %948 = vst.msk [vmem:[#allocation4] sm:$0xff] %vm678, %v945
      %949 = vst.msk [vmem:[#allocation4 + $0x8] sm:$0xff] %vm678, %v946
      %950 = vst.msk [vmem:[#allocation4 + $0x10] sm:$0xff] %vm678, %v947
      %951 = vst.msk [vmem:[#allocation2] sm:$0xff] %vm882, %v828
      %952 = vst.msk [vmem:[#allocation2 + $0x8] sm:$0xff] %vm882, %v829
      %953 = vst.msk [vmem:[#allocation2 + $0x10] sm:$0xff] %vm882, %v830
      // Predicated region
      $region53: #{flux_joint_attention.7} parent=47 // pred_check
        %p954 = pneg %p544
      $region54: #{flux_joint_attention.7} parent=47 // pred_check_branch
        %956 = sbr.rel (%p954) target = $region56
      $region55: #{flux_joint_attention.7} parent=47 // pred_region
        %v957 = vld [vmem:[#allocation3] sm:$0xff]
        %v958 = vld [vmem:[#allocation3 + $0x8] sm:$0xff]
        %v959 = vld [vmem:[#allocation3 + $0x10] sm:$0xff]
        %v960 = vrcp.pop %v957
        %v961 = vrcp.pop %v958
        %v962 = vrcp.pop %v959
        %v963 = vld [vmem:[#allocation4] sm:$0xff]
        %v964 = vld [vmem:[#allocation4 + $0x8] sm:$0xff]
        %v965 = vld [vmem:[#allocation4 + $0x10] sm:$0xff]
        %967 = vset.pattern.permute.xlu0 0
        %968 = vperm.xlu0 %967, %v960
        %v969 = vpop.permute.xlu0 %968
        %972 = vset.pattern.permute.xlu0 0
        %973 = vperm.xlu0 %972, %v961
        %v974 = vpop.permute.xlu0 %973
        %977 = vset.pattern.permute.xlu0 0
        %978 = vperm.xlu0 %977, %v962
        %v979 = vpop.permute.xlu0 %978
        %v981 = vmul.f32 %v963, %v969
        %v982 = vmul.f32 %v964, %v974
        %v983 = vmul.f32 %v965, %v979
        %984 = vst.msk [vmem:[%s542] sm:$0xff] %vm678, %v981
        %985 = vst.msk [vmem:[%s542 + $0x8] sm:$0xff] %vm678, %v982
        %986 = vst.msk [vmem:[%s542 + $0x10] sm:$0xff] %vm678, %v983
      $region56: #{flux_joint_attention.7} parent=47 // pred_fallthru
        _
      %s987 = smul.u32 3, %s26
      %p988 = scmp.lt.s32.totalorder %s24, 1
      %s989 = scalar_select %p988, %s24, 1
      %p990 = scmp.lt.s32.totalorder %s25, 3
      %s991 = scalar_select %p990, %s25, 3
      %p992 = scmp.lt.s32.totalorder %s987, 2
      %s993 = scalar_select %p992, %s987, 2
      %s994 = smul.addr %s991, 3
      %s995 = sadd.s32 %s993, %s994
      %s996 = smul.addr %s989, 12
      %s997 = sadd.s32 %s995, %s996
      %s998 = smul.addr %s997, 8
      %s999 = scalar_lea.vmem %s7, %s998
      // Predicated region
      $region57: #{flux_joint_attention.7} parent=47 // pred_check
        %p1000 = pneg %p260
      $region58: #{flux_joint_attention.7} parent=47 // pred_check_branch
        %1002 = sbr.rel (%p1000) target = $region60
      $region59: #{flux_joint_attention.7} parent=47 // pred_region
        %s1003 = smul.u32 3, %s26
      $region60: #{flux_joint_attention.7} parent=47 // pred_fallthru
        _
    $region48: #{flux_joint_attention.7} parent=5 // pred_fallthru
      _
    %p1004 = scmp.le.s32.totalorder 2, %s13
    // Predicated region
    $region61: #{flux_joint_attention.7} parent=5 // pred_check
      %p1005 = pneg %p1004
    $region62: #{flux_joint_attention.7} parent=5 // pred_check_branch
      %1007 = sbr.rel (%p1005) target = $region64
    $region63: #{flux_joint_attention.7} parent=5 // pred_region
      %s1008 = ssub.s32 %s13, 2
      // Predicated region
      $region65: #{flux_joint_attention.7} parent=63 // pred_check
        %p1009 = pneg %p266
      $region66: #{flux_joint_attention.7} parent=63 // pred_check_branch
        %1011 = sbr.rel (%p1009) target = $region68
      $region67: #{flux_joint_attention.7} parent=63 // pred_region
        %s1012 = smul.u32 3, %s30
        %p1013 = scmp.lt.s32.totalorder %s28, 1
        %s1014 = scalar_select %p1013, %s28, 1
        %p1015 = scmp.lt.s32.totalorder %s29, 3
        %s1016 = scalar_select %p1015, %s29, 3
        %p1017 = scmp.lt.s32.totalorder %s1012, 2
        %s1018 = scalar_select %p1017, %s1012, 2
        %s1019 = smul.addr %s1016, 3
        %s1020 = sadd.s32 %s1018, %s1019
        %s1021 = smul.addr %s1014, 12
        %s1022 = sadd.s32 %s1020, %s1021
        %s1023 = smul.addr %s1022, 8
        %s1024 = scalar_lea.vmem %s7, %s1023
      $region68: #{flux_joint_attention.7} parent=63 // pred_fallthru
        _
    $region64: #{flux_joint_attention.7} parent=5 // pred_fallthru
      _
  $region6: #{flux_joint_attention.7} parent=0 // loop_footer
    %s17 = sadd.s32 1, %s13
  $region7: #{flux_joint_attention.7} parent=0 // loop_footer_branch
    %12 = sbr.rel target = $region3
  $region8: #{flux_joint_attention.7} parent=0 // loop_exit
    _

</llo_original>
